<compile_context>
chip_gen: v5e
topology: v5e:2x2
jax: 0.10.0
libtpu: 0.0.40
codegen_flags: <defaults>
</compile_context>

<pallas_src>
import functools

import jax
import jax.numpy as jnp
from jax.experimental import pallas as pl
from jax.experimental.pallas import tpu as pltpu


# ------------------------------ activations --------------------------------
def _gelu(h):
    # exact (erf) GELU, matching torch.nn.GELU default
    return 0.5 * h * (1.0 + jax.lax.erf(h * (2.0 ** -0.5)))


def _relu(h):
    return jnp.maximum(h, 0.0)


_ACTIVATIONS = {"gelu": _gelu, "relu": _relu}


# Probe once at import whether this Pallas version supports single-buffering the
# constant-index (resident) weights via pipeline_mode=pl.Buffered(1).
def _probe_buffered():
    try:
        pl.BlockSpec((8, 128), lambda i: (0, 0), pipeline_mode=pl.Buffered(1))
        return True
    except Exception:
        return False


_HAS_BUFFERED = _probe_buffered()


# -------------------------------- kernel -----------------------------------
def _projector_kernel(
        x_ref, q_ref, wk_ref, wv_ref, wo_ref, bo_ref,
        g0_ref, be0_ref, w1_ref, b1_ref,
        g1_ref, be1_ref, w2_ref, b2_ref,
        g2_ref, be2_ref, w3_ref, b3_ref,
        g3_ref, be3_ref,
        o_ref, *, eps, activation, mxu_dtype):
    f32 = jnp.float32
    act = _ACTIVATIONS[activation]
    TB, N, C = x_ref.shape

    def mm(a, b):
        # MXU matmul: (optionally bf16) operands, f32 accumulation.
        return jnp.dot(a.astype(mxu_dtype), b.astype(mxu_dtype),
                       preferred_element_type=f32)

    def layer_norm(h, g_ref, b_ref):
        mu = jnp.mean(h, axis=-1, keepdims=True)
        var = jnp.mean(jnp.square(h - mu), axis=-1, keepdims=True)
        hn = (h - mu) * jax.lax.rsqrt(var + eps)
        return hn * g_ref[...].astype(f32) + b_ref[...].astype(f32)

    # ---- Learned_Aggregation_Layer (num_heads == 1, qkv_bias=False) ----
    # q = (cls @ wq) * scale is batch-invariant; precomputed in the wrapper and
    # passed as a (C, 1) column so the logits need no in-kernel k transpose.
    x2 = x_ref[...].reshape(TB * N, C)                          # (TB*N, C)
    k = mm(x2, wk_ref[...])                                     # (TB*N, C) f32
    v = mm(x2, wv_ref[...])                                     # (TB*N, C) f32

    logits = mm(k, q_ref[...]).reshape(TB, N, 1)                # (TB, N, 1) = q @ k^T per protein
    logits = logits - jnp.max(logits, axis=1, keepdims=True)
    e = jnp.exp(logits)
    attn = e / jnp.sum(e, axis=1, keepdims=True)                # softmax; attn_drop(p=0) no-op
    x_cls = jnp.sum(attn * v.reshape(TB, N, C), axis=1)         # (TB, C)
    x_cls = mm(x_cls, wo_ref[...]) + bo_ref[...].astype(f32)    # proj; proj_drop(p=0) no-op
    # TODO(synk): the pickle-append + print side effect of the PyTorch forward is
    # host file I/O with no Pallas equivalent; intentionally not implemented.

    # ---- res: (LN -> act -> Linear -> Dropout(0)) x 3 -> LN, then non_linearity ----
    h = act(layer_norm(x_cls, g0_ref, be0_ref))
    h = mm(h, w1_ref[...]) + b1_ref[...].astype(f32)            # (TB, L)
    h = act(layer_norm(h, g1_ref, be1_ref))
    h = mm(h, w2_ref[...]) + b2_ref[...].astype(f32)
    h = act(layer_norm(h, g2_ref, be2_ref))
    h = mm(h, w3_ref[...]) + b3_ref[...].astype(f32)
    h = act(layer_norm(h, g3_ref, be3_ref))                     # final LayerNorm + non_linearity

    o_ref[0] = h.astype(o_ref.dtype)


# ------------------------------ pallas_call --------------------------------
@functools.lru_cache(maxsize=None)
def _build_projector_call(num_steps, tb, N, C, L, x_dtype_name, out_dtype_name,
                          eps, activation, mxu_dtype_name, single_buffer):
    x_dtype = jnp.dtype(x_dtype_name)
    out_dtype = jnp.dtype(out_dtype_name)
    mxu_dtype = jnp.dtype(mxu_dtype_name)

    def const_spec(shape):
        imap = lambda b, _s=shape: (0,) * len(_s)
        if single_buffer:
            # Constant index_map -> the second pipeline buffer is pure VMEM waste.
            return pl.BlockSpec(shape, imap, pipeline_mode=pl.Buffered(1))
        return pl.BlockSpec(shape, imap)

    in_specs = [
        # x: TB full (N, C) token slabs per grid step -> full-height MXU feeds.
        pl.BlockSpec((tb, N, C), lambda b: (b, 0, 0)),
        const_spec((C, 1)),                                             # q column (scale folded in)
        const_spec((C, C)), const_spec((C, C)),                         # wk, wv
        const_spec((C, C)), const_spec((1, C)),                         # wo, bo
        const_spec((1, C)), const_spec((1, C)),                         # ln0 gamma/beta
        const_spec((C, L)), const_spec((1, L)),                         # w1, b1
        const_spec((1, L)), const_spec((1, L)),                         # ln1
        const_spec((L, L)), const_spec((1, L)),                         # w2, b2
        const_spec((1, L)), const_spec((1, L)),                         # ln2
        const_spec((L, L)), const_spec((1, L)),                         # w3, b3
        const_spec((1, L)), const_spec((1, L)),                         # ln3
    ]
    # Lane-dense (L % 128 == 0) and sublane-dense (TB rows) output stores.
    out_spec = pl.BlockSpec((1, tb, L), lambda b: (b, 0, 0))

    # Advisory cost estimate so XLA schedules around the custom call sensibly.
    B = num_steps * tb
    flops = B * (2 * (2 * N * C * C)              # k and v projections
                 + 2 * N * C                      # logits k @ q
                 + 2 * N * C                      # attn-weighted sum of v
                 + 2 * C * C                      # aggregation output proj
                 + 2 * C * L + 2 * (2 * L * L))   # res MLP
    transcendentals = B * (N + C + 3 * L + 8)
    weight_elems = C + 3 * C * C + C * L + 2 * L * L
    bytes_accessed = int(B * N * C * x_dtype.itemsize
                         + weight_elems * mxu_dtype.itemsize
                         + (3 * C + 9 * L) * 4
                         + B * L * out_dtype.itemsize)
    cost = pl.CostEstimate(flops=int(flops), transcendentals=int(transcendentals),
                           bytes_accessed=bytes_accessed)

    kernel = functools.partial(_projector_kernel, eps=eps, activation=activation,
                               mxu_dtype=mxu_dtype)
    return pl.pallas_call(
        kernel,
        out_shape=jax.ShapeDtypeStruct((num_steps, tb, L), out_dtype),
        grid_spec=pltpu.PrefetchScalarGridSpec(
            num_scalar_prefetch=0,
            grid=(num_steps,),
            in_specs=in_specs,
            out_specs=out_spec,
        ),
        compiler_params=pltpu.CompilerParams(
            dimension_semantics=("parallel",),
            # Under v7x's 64 MiB/TC with headroom; also safe on v5e/v6e (128 MiB).
            # TODO(synk): for very long proteins (N*C f32 block > ~20 MiB) add a
            # second "arbitrary" grid axis chunking N with an online-softmax
            # accumulator (flash-style) so the x double buffer fits v7x VMEM.
            vmem_limit_bytes=48 * 1024 * 1024,
        ),
        cost_estimate=cost,
    )


def large_protein_projector(x, params, *, eps=1e-5, activation="gelu",
                            mxu_dtype=jnp.float32, proteins_per_step=8):
    """x: (B, N, C) or (N, C) protein token embeddings -> (B, L) (or (L,) if B == 1).

    mxu_dtype=jnp.bfloat16 feeds the MXU bf16 operands (f32 accumulation, f32
    LN/softmax/GELU) for v5e/v6e/v7x throughput on real hardware; the default
    stays f32 so the kernel also runs under interpret/CPU execution.
    """
    if x.ndim == 2:
        x = x[None]
    B, N, C = x.shape
    L = params["w3"].shape[-1]
    scale = float(C) ** -0.5            # head_dim ** -0.5 with num_heads == 1
    # TODO(synk): num_heads > 1 aggregation (per-head softmax) not implemented;
    # the module default num_heads=1 is what is lowered here.

    mxu_dtype = jnp.dtype(mxu_dtype)
    f32 = jnp.float32

    # Batch-invariant q projection hoisted out of the kernel, stored as a (C, 1)
    # column (scale folded in) so the attention logits are k @ q (no transpose).
    q_col = (jnp.dot(params["cls"].astype(f32), params["wq"].astype(f32))
             * scale).reshape(C, 1).astype(mxu_dtype)

    def cast_w(name):
        w = params[name]
        return w.astype(mxu_dtype) if jnp.dtype(w.dtype) != mxu_dtype else w

    # TB proteins per grid step: real MXU row occupancy for the res-MLP matmuls,
    # while keeping >= 2 parallel grid steps (v7x has 2 TensorCores) when B >= 2.
    tb = max(1, min(int(proteins_per_step), B // 2)) if B >= 2 else 1
    num_steps = -(-B // tb)
    b_pad = num_steps * tb

    # Cast x once in the wrapper (bf16 path halves the per-step DMA + x buffers).
    x_in = x.astype(mxu_dtype) if mxu_dtype != jnp.dtype(x.dtype) else x
    if b_pad != B:
        x_in = jnp.concatenate(
            [x_in, jnp.zeros((b_pad - B, N, C), x_in.dtype)], axis=0)

    args = (x_in, q_col, cast_w("wk"), cast_w("wv"), cast_w("wo"), params["bo"],
            params["ln0_g"], params["ln0_b"], cast_w("w1"), params["b1"],
            params["ln1_g"], params["ln1_b"], cast_w("w2"), params["b2"],
            params["ln2_g"], params["ln2_b"], cast_w("w3"), params["b3"],
            params["ln3_g"], params["ln3_b"])

    call = _build_projector_call(
        int(num_steps), int(tb), int(N), int(C), int(L),
        jnp.dtype(x_in.dtype).name, jnp.dtype(x.dtype).name,
        float(eps), activation, mxu_dtype.name, _HAS_BUFFERED)

    out = call(*args).reshape(b_pad, L)[:B]
    if B == 1:
        out = out[0]                    # mimic torch .squeeze() for a single protein
    return out


# ----------------------------- params / reference ---------------------------
def init_params(key, dim, latent_dim, dtype=jnp.float32):
    ks = jax.random.split(key, 12)
    s = 0.02

    def w(k, shape):
        return jax.random.normal(k, shape, dtype) * s

    ones = lambda n: jnp.ones((1, n), dtype)
    zeros = lambda n: jnp.zeros((1, n), dtype)
    return {
        # Learned_Aggregation_Layer (weights stored input-major: y = x @ w + b)
        "cls": jax.random.normal(ks[0], (1, dim), dtype),
        "wq": w(ks[1], (dim, dim)),
        "wk": w(ks[2], (dim, dim)),
        "wv": w(ks[3], (dim, dim)),
        "wo": w(ks[4], (dim, dim)),
        "bo": w(ks[5], (1, dim)),
        # res MLP stack
        "ln0_g": ones(dim), "ln0_b": zeros(dim),
        "w1": w(ks[6], (dim, latent_dim)), "b1": w(ks[7], (1, latent_dim)),
        "ln1_g": ones(latent_dim), "ln1_b": zeros(latent_dim),
        "w2": w(ks[8], (latent_dim, latent_dim)), "b2": w(ks[9], (1, latent_dim)),
        "ln2_g": ones(latent_dim), "ln2_b": zeros(latent_dim),
        "w3": w(ks[10], (latent_dim, latent_dim)), "b3": w(ks[11], (1, latent_dim)),
        "ln3_g": ones(latent_dim), "ln3_b": zeros(latent_dim),
    }


def _reference(x, p, *, eps=1e-5, activation="gelu"):
    """Pure-JAX reference mirroring the PyTorch forward."""
    if x.ndim == 2:
        x = x[None]
    f32 = jnp.float32
    act = _ACTIVATIONS[activation]

    def mm(a, b):
        return jnp.matmul(a.astype(f32), b.astype(f32),
                          preferred_element_type=f32)

    def ln(h, g, b):
        mu = jnp.mean(h, axis=-1, keepdims=True)
        var = jnp.mean(jnp.square(h - mu), axis=-1, keepdims=True)
        return (h - mu) * jax.lax.rsqrt(var + eps) * g + b

    B, N, C = x.shape
    scale = float(C) ** -0.5
    q = mm(p["cls"], p["wq"]) * scale                  # (1, C)
    k = mm(x, p["wk"])                                 # (B, N, C)
    v = mm(x, p["wv"])
    logits = mm(q, jnp.swapaxes(k, -1, -2))            # (B, 1, N)
    logits = logits - jnp.max(logits, axis=-1, keepdims=True)
    e = jnp.exp(logits)
    attn = e / jnp.sum(e, axis=-1, keepdims=True)
    x_cls = mm(attn, v)                                # (B, 1, C)
    x_cls = mm(x_cls, p["wo"]) + p["bo"]

    h = act(ln(x_cls, p["ln0_g"], p["ln0_b"]))
    h = mm(h, p["w1"]) + p["b1"]
    h = act(ln(h, p["ln1_g"], p["ln1_b"]))
    h = mm(h, p["w2"]) + p["b2"]
    h = act(ln(h, p["ln2_g"], p["ln2_b"]))
    h = mm(h, p["w3"]) + p["b3"]
    h = act(ln(h, p["ln3_g"], p["ln3_b"]))
    out = h[:, 0, :]
    return out if out.shape[0] > 1 else out[0]


# ---------------------------------- main ------------------------------------
if __name__ == "__main__":
    key = jax.random.PRNGKey(0)
    kx, kp = jax.random.split(key)

    # Small but lane-dense shapes: target_dim and latent_dim are multiples of 128.
    batch, seq, target_dim, latent_dim = 2, 64, 256, 128
    x = jax.random.normal(kx, (batch, seq, target_dim), jnp.float32)
    params = init_params(kp, target_dim, latent_dim)

    # f32 MXU-operand path. (bf16 operands — mxu_dtype=jnp.bfloat16 — are supported
    # by the kernel for real-TPU runs but not exercised here: the interpret/CPU
    # execution path lacks a BF16xBF16=F32 dot.)
    out = jax.block_until_ready(large_protein_projector(x, params))
    ref = _reference(x, params)
    assert out.shape == (batch, latent_dim), out.shape
    assert jnp.allclose(out, ref, atol=1e-3, rtol=1e-3), "mismatch vs reference"

    print("KERNEL_OK")
</pallas_src>

<mosaic_0001>
module attributes {stable_mosaic.version = 11 : i64} {
  func.func @_projector_kernel(%arg0: i32, %arg1: memref<1x64x256xf32, #tpu.memory_space<vmem>>, %arg2: memref<256x1xf32, #tpu.memory_space<vmem>>, %arg3: memref<256x256xf32, #tpu.memory_space<vmem>>, %arg4: memref<256x256xf32, #tpu.memory_space<vmem>>, %arg5: memref<256x256xf32, #tpu.memory_space<vmem>>, %arg6: memref<1x256xf32, #tpu.memory_space<vmem>>, %arg7: memref<1x256xf32, #tpu.memory_space<vmem>>, %arg8: memref<1x256xf32, #tpu.memory_space<vmem>>, %arg9: memref<256x128xf32, #tpu.memory_space<vmem>>, %arg10: memref<1x128xf32, #tpu.memory_space<vmem>>, %arg11: memref<1x128xf32, #tpu.memory_space<vmem>>, %arg12: memref<1x128xf32, #tpu.memory_space<vmem>>, %arg13: memref<128x128xf32, #tpu.memory_space<vmem>>, %arg14: memref<1x128xf32, #tpu.memory_space<vmem>>, %arg15: memref<1x128xf32, #tpu.memory_space<vmem>>, %arg16: memref<1x128xf32, #tpu.memory_space<vmem>>, %arg17: memref<128x128xf32, #tpu.memory_space<vmem>>, %arg18: memref<1x128xf32, #tpu.memory_space<vmem>>, %arg19: memref<1x128xf32, #tpu.memory_space<vmem>>, %arg20: memref<1x128xf32, #tpu.memory_space<vmem>>, %arg21: memref<1x1x128xf32, #tpu.memory_space<vmem>>) attributes {dimension_semantics = [#tpu.dimension_semantics<parallel>], iteration_bounds = array<i64: 2>, scalar_prefetch = 0 : i64, scratch_operands = 0 : i64, tpu.core_type = #tpu.core_type<tc>, window_params = [{transform_indices = @transform_0, window_bounds = array<i64: 1, 64, 256>}, {pipeline_mode = #tpu.pipeline_mode<synchronous>, transform_indices = @transform_1, window_bounds = array<i64: 256, 1>}, {pipeline_mode = #tpu.pipeline_mode<synchronous>, transform_indices = @transform_2, window_bounds = array<i64: 256, 256>}, {pipeline_mode = #tpu.pipeline_mode<synchronous>, transform_indices = @transform_3, window_bounds = array<i64: 256, 256>}, {pipeline_mode = #tpu.pipeline_mode<synchronous>, transform_indices = @transform_4, window_bounds = array<i64: 256, 256>}, {pipeline_mode = #tpu.pipeline_mode<synchronous>, transform_indices = @transform_5, window_bounds = array<i64: 1, 256>}, {pipeline_mode = #tpu.pipeline_mode<synchronous>, transform_indices = @transform_6, window_bounds = array<i64: 1, 256>}, {pipeline_mode = #tpu.pipeline_mode<synchronous>, transform_indices = @transform_7, window_bounds = array<i64: 1, 256>}, {pipeline_mode = #tpu.pipeline_mode<synchronous>, transform_indices = @transform_8, window_bounds = array<i64: 256, 128>}, {pipeline_mode = #tpu.pipeline_mode<synchronous>, transform_indices = @transform_9, window_bounds = array<i64: 1, 128>}, {pipeline_mode = #tpu.pipeline_mode<synchronous>, transform_indices = @transform_10, window_bounds = array<i64: 1, 128>}, {pipeline_mode = #tpu.pipeline_mode<synchronous>, transform_indices = @transform_11, window_bounds = array<i64: 1, 128>}, {pipeline_mode = #tpu.pipeline_mode<synchronous>, transform_indices = @transform_12, window_bounds = array<i64: 128, 128>}, {pipeline_mode = #tpu.pipeline_mode<synchronous>, transform_indices = @transform_13, window_bounds = array<i64: 1, 128>}, {pipeline_mode = #tpu.pipeline_mode<synchronous>, transform_indices = @transform_14, window_bounds = array<i64: 1, 128>}, {pipeline_mode = #tpu.pipeline_mode<synchronous>, transform_indices = @transform_15, window_bounds = array<i64: 1, 128>}, {pipeline_mode = #tpu.pipeline_mode<synchronous>, transform_indices = @transform_16, window_bounds = array<i64: 128, 128>}, {pipeline_mode = #tpu.pipeline_mode<synchronous>, transform_indices = @transform_17, window_bounds = array<i64: 1, 128>}, {pipeline_mode = #tpu.pipeline_mode<synchronous>, transform_indices = @transform_18, window_bounds = array<i64: 1, 128>}, {pipeline_mode = #tpu.pipeline_mode<synchronous>, transform_indices = @transform_19, window_bounds = array<i64: 1, 128>}, {transform_indices = @transform_20, window_bounds = array<i64: 1, 1, 128>}]} {
    %c0 = arith.constant 0 : index
    %c0_0 = arith.constant 0 : index
    %c0_1 = arith.constant 0 : index
    %0 = vector.load %arg1[%c0, %c0_0, %c0_1] : memref<1x64x256xf32, #tpu.memory_space<vmem>>, vector<1x64x256xf32>
    %1 = vector.shape_cast %0 : vector<1x64x256xf32> to vector<64x256xf32>
    %c0_2 = arith.constant 0 : index
    %c0_3 = arith.constant 0 : index
    %2 = vector.load %arg3[%c0_2, %c0_3] : memref<256x256xf32, #tpu.memory_space<vmem>>, vector<256x256xf32>
    %cst = arith.constant dense<0.000000e+00> : vector<64x256xf32>
    %3 = tpu.matmul %1, %2, %cst {dimension_numbers = #tpu.dot_dimension_numbers<[1], [0], [0], [1], [0, 0, 1, 1], [], []>} : vector<64x256xf32>, vector<256x256xf32>, vector<64x256xf32> -> vector<64x256xf32>
    %c0_4 = arith.constant 0 : index
    %c0_5 = arith.constant 0 : index
    %4 = vector.load %arg4[%c0_4, %c0_5] : memref<256x256xf32, #tpu.memory_space<vmem>>, vector<256x256xf32>
    %cst_6 = arith.constant dense<0.000000e+00> : vector<64x256xf32>
    %5 = tpu.matmul %1, %4, %cst_6 {dimension_numbers = #tpu.dot_dimension_numbers<[1], [0], [0], [1], [0, 0, 1, 1], [], []>} : vector<64x256xf32>, vector<256x256xf32>, vector<64x256xf32> -> vector<64x256xf32>
    %c0_7 = arith.constant 0 : index
    %c0_8 = arith.constant 0 : index
    %6 = vector.load %arg2[%c0_7, %c0_8] : memref<256x1xf32, #tpu.memory_space<vmem>>, vector<256x1xf32>
    %cst_9 = arith.constant dense<0.000000e+00> : vector<64x1xf32>
    %7 = tpu.matmul %3, %6, %cst_9 {dimension_numbers = #tpu.dot_dimension_numbers<[1], [0], [0], [1], [0, 0, 1, 1], [], []>} : vector<64x256xf32>, vector<256x1xf32>, vector<64x1xf32> -> vector<64x1xf32>
    %8 = vector.shape_cast %7 : vector<64x1xf32> to vector<1x64x1xf32>
    %cst_10 = arith.constant dense<0xFF800000> : vector<1x1xf32>
    %9 = vector.multi_reduction <maximumf>, %8, %cst_10 [1] : vector<1x64x1xf32> to vector<1x1xf32>
    %10 = vector.shape_cast %9 : vector<1x1xf32> to vector<1x1x1xf32>
    %11 = vector.broadcast %10 : vector<1x1x1xf32> to vector<1x64x1xf32>
    %12 = arith.subf %8, %11 : vector<1x64x1xf32>
    %13 = math.exp %12 : vector<1x64x1xf32>
    %cst_11 = arith.constant dense<0.000000e+00> : vector<1x1xf32>
    %14 = vector.multi_reduction <add>, %13, %cst_11 [1] : vector<1x64x1xf32> to vector<1x1xf32>
    %15 = vector.shape_cast %14 : vector<1x1xf32> to vector<1x1x1xf32>
    %16 = vector.broadcast %15 : vector<1x1x1xf32> to vector<1x64x1xf32>
    %17 = arith.divf %13, %16 : vector<1x64x1xf32>
    %18 = vector.shape_cast %5 : vector<64x256xf32> to vector<1x64x256xf32>
    %19 = vector.broadcast %17 : vector<1x64x1xf32> to vector<1x64x256xf32>
    %20 = arith.mulf %19, %18 : vector<1x64x256xf32>
    %cst_12 = arith.constant dense<0.000000e+00> : vector<1x256xf32>
    %21 = vector.multi_reduction <add>, %20, %cst_12 [1] : vector<1x64x256xf32> to vector<1x256xf32>
    %c0_13 = arith.constant 0 : index
    %c0_14 = arith.constant 0 : index
    %22 = vector.load %arg5[%c0_13, %c0_14] : memref<256x256xf32, #tpu.memory_space<vmem>>, vector<256x256xf32>
    %cst_15 = arith.constant dense<0.000000e+00> : vector<1x256xf32>
    %23 = tpu.matmul %21, %22, %cst_15 {dimension_numbers = #tpu.dot_dimension_numbers<[1], [0], [0], [1], [0, 0, 1, 1], [], []>} : vector<1x256xf32>, vector<256x256xf32>, vector<1x256xf32> -> vector<1x256xf32>
    %c0_16 = arith.constant 0 : index
    %c0_17 = arith.constant 0 : index
    %24 = vector.load %arg6[%c0_16, %c0_17] : memref<1x256xf32, #tpu.memory_space<vmem>>, vector<1x256xf32>
    %25 = arith.addf %23, %24 : vector<1x256xf32>
    %cst_18 = arith.constant dense<0.000000e+00> : vector<1xf32>
    %26 = vector.multi_reduction <add>, %25, %cst_18 [1] : vector<1x256xf32> to vector<1xf32>
    %27 = vector.shape_cast %26 : vector<1xf32> to vector<1x1xf32>
    %cst_19 = arith.constant 2.560000e+02 : f32
    %28 = vector.broadcast %cst_19 : f32 to vector<1x1xf32>
    %29 = arith.divf %27, %28 : vector<1x1xf32>
    %30 = vector.broadcast %29 : vector<1x1xf32> to vector<1x256xf32>
    %31 = arith.subf %25, %30 : vector<1x256xf32>
    %32 = arith.mulf %31, %31 : vector<1x256xf32>
    %cst_20 = arith.constant dense<0.000000e+00> : vector<1xf32>
    %33 = vector.multi_reduction <add>, %32, %cst_20 [1] : vector<1x256xf32> to vector<1xf32>
    %34 = vector.shape_cast %33 : vector<1xf32> to vector<1x1xf32>
    %cst_21 = arith.constant 2.560000e+02 : f32
    %35 = vector.broadcast %cst_21 : f32 to vector<1x1xf32>
    %36 = arith.divf %34, %35 : vector<1x1xf32>
    %37 = vector.broadcast %29 : vector<1x1xf32> to vector<1x256xf32>
    %38 = arith.subf %25, %37 : vector<1x256xf32>
    %cst_22 = arith.constant 9.99999974E-6 : f32
    %39 = vector.broadcast %cst_22 : f32 to vector<1x1xf32>
    %40 = arith.addf %36, %39 : vector<1x1xf32>
    %41 = math.rsqrt %40 : vector<1x1xf32>
    %42 = vector.broadcast %41 : vector<1x1xf32> to vector<1x256xf32>
    %43 = arith.mulf %38, %42 : vector<1x256xf32>
    %c0_23 = arith.constant 0 : index
    %c0_24 = arith.constant 0 : index
    %44 = vector.load %arg7[%c0_23, %c0_24] : memref<1x256xf32, #tpu.memory_space<vmem>>, vector<1x256xf32>
    %45 = arith.mulf %43, %44 : vector<1x256xf32>
    %c0_25 = arith.constant 0 : index
    %c0_26 = arith.constant 0 : index
    %46 = vector.load %arg8[%c0_25, %c0_26] : memref<1x256xf32, #tpu.memory_space<vmem>>, vector<1x256xf32>
    %47 = arith.addf %45, %46 : vector<1x256xf32>
    %cst_27 = arith.constant 5.000000e-01 : f32
    %48 = vector.broadcast %cst_27 : f32 to vector<1x256xf32>
    %49 = arith.mulf %48, %47 : vector<1x256xf32>
    %cst_28 = arith.constant 0.707106769 : f32
    %50 = vector.broadcast %cst_28 : f32 to vector<1x256xf32>
    %51 = arith.mulf %47, %50 : vector<1x256xf32>
    %52 = math.erf %51 : vector<1x256xf32>
    %cst_29 = arith.constant 1.000000e+00 : f32
    %53 = vector.broadcast %cst_29 : f32 to vector<1x256xf32>
    %54 = arith.addf %53, %52 : vector<1x256xf32>
    %55 = arith.mulf %49, %54 : vector<1x256xf32>
    %c0_30 = arith.constant 0 : index
    %c0_31 = arith.constant 0 : index
    %56 = vector.load %arg9[%c0_30, %c0_31] : memref<256x128xf32, #tpu.memory_space<vmem>>, vector<256x128xf32>
    %cst_32 = arith.constant dense<0.000000e+00> : vector<1x128xf32>
    %57 = tpu.matmul %55, %56, %cst_32 {dimension_numbers = #tpu.dot_dimension_numbers<[1], [0], [0], [1], [0, 0, 1, 1], [], []>} : vector<1x256xf32>, vector<256x128xf32>, vector<1x128xf32> -> vector<1x128xf32>
    %c0_33 = arith.constant 0 : index
    %c0_34 = arith.constant 0 : index
    %58 = vector.load %arg10[%c0_33, %c0_34] : memref<1x128xf32, #tpu.memory_space<vmem>>, vector<1x128xf32>
    %59 = arith.addf %57, %58 : vector<1x128xf32>
    %cst_35 = arith.constant dense<0.000000e+00> : vector<1xf32>
    %60 = vector.multi_reduction <add>, %59, %cst_35 [1] : vector<1x128xf32> to vector<1xf32>
    %61 = vector.shape_cast %60 : vector<1xf32> to vector<1x1xf32>
    %cst_36 = arith.constant 1.280000e+02 : f32
    %62 = vector.broadcast %cst_36 : f32 to vector<1x1xf32>
    %63 = arith.divf %61, %62 : vector<1x1xf32>
    %64 = vector.broadcast %63 : vector<1x1xf32> to vector<1x128xf32>
    %65 = arith.subf %59, %64 : vector<1x128xf32>
    %66 = arith.mulf %65, %65 : vector<1x128xf32>
    %cst_37 = arith.constant dense<0.000000e+00> : vector<1xf32>
    %67 = vector.multi_reduction <add>, %66, %cst_37 [1] : vector<1x128xf32> to vector<1xf32>
    %68 = vector.shape_cast %67 : vector<1xf32> to vector<1x1xf32>
    %cst_38 = arith.constant 1.280000e+02 : f32
    %69 = vector.broadcast %cst_38 : f32 to vector<1x1xf32>
    %70 = arith.divf %68, %69 : vector<1x1xf32>
    %71 = vector.broadcast %63 : vector<1x1xf32> to vector<1x128xf32>
    %72 = arith.subf %59, %71 : vector<1x128xf32>
    %cst_39 = arith.constant 9.99999974E-6 : f32
    %73 = vector.broadcast %cst_39 : f32 to vector<1x1xf32>
    %74 = arith.addf %70, %73 : vector<1x1xf32>
    %75 = math.rsqrt %74 : vector<1x1xf32>
    %76 = vector.broadcast %75 : vector<1x1xf32> to vector<1x128xf32>
    %77 = arith.mulf %72, %76 : vector<1x128xf32>
    %c0_40 = arith.constant 0 : index
    %c0_41 = arith.constant 0 : index
    %78 = vector.load %arg11[%c0_40, %c0_41] : memref<1x128xf32, #tpu.memory_space<vmem>>, vector<1x128xf32>
    %79 = arith.mulf %77, %78 : vector<1x128xf32>
    %c0_42 = arith.constant 0 : index
    %c0_43 = arith.constant 0 : index
    %80 = vector.load %arg12[%c0_42, %c0_43] : memref<1x128xf32, #tpu.memory_space<vmem>>, vector<1x128xf32>
    %81 = arith.addf %79, %80 : vector<1x128xf32>
    %cst_44 = arith.constant 5.000000e-01 : f32
    %82 = vector.broadcast %cst_44 : f32 to vector<1x128xf32>
    %83 = arith.mulf %82, %81 : vector<1x128xf32>
    %cst_45 = arith.constant 0.707106769 : f32
    %84 = vector.broadcast %cst_45 : f32 to vector<1x128xf32>
    %85 = arith.mulf %81, %84 : vector<1x128xf32>
    %86 = math.erf %85 : vector<1x128xf32>
    %cst_46 = arith.constant 1.000000e+00 : f32
    %87 = vector.broadcast %cst_46 : f32 to vector<1x128xf32>
    %88 = arith.addf %87, %86 : vector<1x128xf32>
    %89 = arith.mulf %83, %88 : vector<1x128xf32>
    %c0_47 = arith.constant 0 : index
    %c0_48 = arith.constant 0 : index
    %90 = vector.load %arg13[%c0_47, %c0_48] : memref<128x128xf32, #tpu.memory_space<vmem>>, vector<128x128xf32>
    %cst_49 = arith.constant dense<0.000000e+00> : vector<1x128xf32>
    %91 = tpu.matmul %89, %90, %cst_49 {dimension_numbers = #tpu.dot_dimension_numbers<[1], [0], [0], [1], [0, 0, 1, 1], [], []>} : vector<1x128xf32>, vector<128x128xf32>, vector<1x128xf32> -> vector<1x128xf32>
    %c0_50 = arith.constant 0 : index
    %c0_51 = arith.constant 0 : index
    %92 = vector.load %arg14[%c0_50, %c0_51] : memref<1x128xf32, #tpu.memory_space<vmem>>, vector<1x128xf32>
    %93 = arith.addf %91, %92 : vector<1x128xf32>
    %cst_52 = arith.constant dense<0.000000e+00> : vector<1xf32>
    %94 = vector.multi_reduction <add>, %93, %cst_52 [1] : vector<1x128xf32> to vector<1xf32>
    %95 = vector.shape_cast %94 : vector<1xf32> to vector<1x1xf32>
    %cst_53 = arith.constant 1.280000e+02 : f32
    %96 = vector.broadcast %cst_53 : f32 to vector<1x1xf32>
    %97 = arith.divf %95, %96 : vector<1x1xf32>
    %98 = vector.broadcast %97 : vector<1x1xf32> to vector<1x128xf32>
    %99 = arith.subf %93, %98 : vector<1x128xf32>
    %100 = arith.mulf %99, %99 : vector<1x128xf32>
    %cst_54 = arith.constant dense<0.000000e+00> : vector<1xf32>
    %101 = vector.multi_reduction <add>, %100, %cst_54 [1] : vector<1x128xf32> to vector<1xf32>
    %102 = vector.shape_cast %101 : vector<1xf32> to vector<1x1xf32>
    %cst_55 = arith.constant 1.280000e+02 : f32
    %103 = vector.broadcast %cst_55 : f32 to vector<1x1xf32>
    %104 = arith.divf %102, %103 : vector<1x1xf32>
    %105 = vector.broadcast %97 : vector<1x1xf32> to vector<1x128xf32>
    %106 = arith.subf %93, %105 : vector<1x128xf32>
    %cst_56 = arith.constant 9.99999974E-6 : f32
    %107 = vector.broadcast %cst_56 : f32 to vector<1x1xf32>
    %108 = arith.addf %104, %107 : vector<1x1xf32>
    %109 = math.rsqrt %108 : vector<1x1xf32>
    %110 = vector.broadcast %109 : vector<1x1xf32> to vector<1x128xf32>
    %111 = arith.mulf %106, %110 : vector<1x128xf32>
    %c0_57 = arith.constant 0 : index
    %c0_58 = arith.constant 0 : index
    %112 = vector.load %arg15[%c0_57, %c0_58] : memref<1x128xf32, #tpu.memory_space<vmem>>, vector<1x128xf32>
    %113 = arith.mulf %111, %112 : vector<1x128xf32>
    %c0_59 = arith.constant 0 : index
    %c0_60 = arith.constant 0 : index
    %114 = vector.load %arg16[%c0_59, %c0_60] : memref<1x128xf32, #tpu.memory_space<vmem>>, vector<1x128xf32>
    %115 = arith.addf %113, %114 : vector<1x128xf32>
    %cst_61 = arith.constant 5.000000e-01 : f32
    %116 = vector.broadcast %cst_61 : f32 to vector<1x128xf32>
    %117 = arith.mulf %116, %115 : vector<1x128xf32>
    %cst_62 = arith.constant 0.707106769 : f32
    %118 = vector.broadcast %cst_62 : f32 to vector<1x128xf32>
    %119 = arith.mulf %115, %118 : vector<1x128xf32>
    %120 = math.erf %119 : vector<1x128xf32>
    %cst_63 = arith.constant 1.000000e+00 : f32
    %121 = vector.broadcast %cst_63 : f32 to vector<1x128xf32>
    %122 = arith.addf %121, %120 : vector<1x128xf32>
    %123 = arith.mulf %117, %122 : vector<1x128xf32>
    %c0_64 = arith.constant 0 : index
    %c0_65 = arith.constant 0 : index
    %124 = vector.load %arg17[%c0_64, %c0_65] : memref<128x128xf32, #tpu.memory_space<vmem>>, vector<128x128xf32>
    %cst_66 = arith.constant dense<0.000000e+00> : vector<1x128xf32>
    %125 = tpu.matmul %123, %124, %cst_66 {dimension_numbers = #tpu.dot_dimension_numbers<[1], [0], [0], [1], [0, 0, 1, 1], [], []>} : vector<1x128xf32>, vector<128x128xf32>, vector<1x128xf32> -> vector<1x128xf32>
    %c0_67 = arith.constant 0 : index
    %c0_68 = arith.constant 0 : index
    %126 = vector.load %arg18[%c0_67, %c0_68] : memref<1x128xf32, #tpu.memory_space<vmem>>, vector<1x128xf32>
    %127 = arith.addf %125, %126 : vector<1x128xf32>
    %cst_69 = arith.constant dense<0.000000e+00> : vector<1xf32>
    %128 = vector.multi_reduction <add>, %127, %cst_69 [1] : vector<1x128xf32> to vector<1xf32>
    %129 = vector.shape_cast %128 : vector<1xf32> to vector<1x1xf32>
    %cst_70 = arith.constant 1.280000e+02 : f32
    %130 = vector.broadcast %cst_70 : f32 to vector<1x1xf32>
    %131 = arith.divf %129, %130 : vector<1x1xf32>
    %132 = vector.broadcast %131 : vector<1x1xf32> to vector<1x128xf32>
    %133 = arith.subf %127, %132 : vector<1x128xf32>
    %134 = arith.mulf %133, %133 : vector<1x128xf32>
    %cst_71 = arith.constant dense<0.000000e+00> : vector<1xf32>
    %135 = vector.multi_reduction <add>, %134, %cst_71 [1] : vector<1x128xf32> to vector<1xf32>
    %136 = vector.shape_cast %135 : vector<1xf32> to vector<1x1xf32>
    %cst_72 = arith.constant 1.280000e+02 : f32
    %137 = vector.broadcast %cst_72 : f32 to vector<1x1xf32>
    %138 = arith.divf %136, %137 : vector<1x1xf32>
    %139 = vector.broadcast %131 : vector<1x1xf32> to vector<1x128xf32>
    %140 = arith.subf %127, %139 : vector<1x128xf32>
    %cst_73 = arith.constant 9.99999974E-6 : f32
    %141 = vector.broadcast %cst_73 : f32 to vector<1x1xf32>
    %142 = arith.addf %138, %141 : vector<1x1xf32>
    %143 = math.rsqrt %142 : vector<1x1xf32>
    %144 = vector.broadcast %143 : vector<1x1xf32> to vector<1x128xf32>
    %145 = arith.mulf %140, %144 : vector<1x128xf32>
    %c0_74 = arith.constant 0 : index
    %c0_75 = arith.constant 0 : index
    %146 = vector.load %arg19[%c0_74, %c0_75] : memref<1x128xf32, #tpu.memory_space<vmem>>, vector<1x128xf32>
    %147 = arith.mulf %145, %146 : vector<1x128xf32>
    %c0_76 = arith.constant 0 : index
    %c0_77 = arith.constant 0 : index
    %148 = vector.load %arg20[%c0_76, %c0_77] : memref<1x128xf32, #tpu.memory_space<vmem>>, vector<1x128xf32>
    %149 = arith.addf %147, %148 : vector<1x128xf32>
    %cst_78 = arith.constant 5.000000e-01 : f32
    %150 = vector.broadcast %cst_78 : f32 to vector<1x128xf32>
    %151 = arith.mulf %150, %149 : vector<1x128xf32>
    %cst_79 = arith.constant 0.707106769 : f32
    %152 = vector.broadcast %cst_79 : f32 to vector<1x128xf32>
    %153 = arith.mulf %149, %152 : vector<1x128xf32>
    %154 = math.erf %153 : vector<1x128xf32>
    %cst_80 = arith.constant 1.000000e+00 : f32
    %155 = vector.broadcast %cst_80 : f32 to vector<1x128xf32>
    %156 = arith.addf %155, %154 : vector<1x128xf32>
    %157 = arith.mulf %151, %156 : vector<1x128xf32>
    %c0_81 = arith.constant 0 : index
    %c0_82 = arith.constant 0 : index
    %c0_83 = arith.constant 0 : index
    %158 = vector.load %arg21[%c0_81, %c0_82, %c0_83] : memref<1x1x128xf32, #tpu.memory_space<vmem>>, vector<1x1x128xf32>
    %159 = vector.shape_cast %158 : vector<1x1x128xf32> to vector<1x128xf32>
    %160 = vector.shape_cast %157 : vector<1x128xf32> to vector<1x1x128xf32>
    tpu.vector_store %arg21[%c0_81, %c0_82, %c0_83], %160 {strides = array<i32>} : memref<1x1x128xf32, #tpu.memory_space<vmem>>, vector<1x1x128xf32>,
    return
  }
  func.func @transform_0(%arg0: i32) -> (i32, i32, i32) {
    %c0_i32 = arith.constant 0 : i32
    %c0_i32_0 = arith.constant 0 : i32
    %c0_i32_1 = arith.constant 0 : i32
    return %arg0, %c0_i32, %c0_i32_0 : i32, i32, i32
  }
  func.func @transform_1(%arg0: i32) -> (i32, i32) {
    %c0_i32 = arith.constant 0 : i32
    %c0_i32_0 = arith.constant 0 : i32
    %c0_i32_1 = arith.constant 0 : i32
    return %c0_i32, %c0_i32_0 : i32, i32
  }
  func.func @transform_2(%arg0: i32) -> (i32, i32) {
    %c0_i32 = arith.constant 0 : i32
    %c0_i32_0 = arith.constant 0 : i32
    %c0_i32_1 = arith.constant 0 : i32
    return %c0_i32, %c0_i32_0 : i32, i32
  }
  func.func @transform_3(%arg0: i32) -> (i32, i32) {
    %c0_i32 = arith.constant 0 : i32
    %c0_i32_0 = arith.constant 0 : i32
    %c0_i32_1 = arith.constant 0 : i32
    return %c0_i32, %c0_i32_0 : i32, i32
  }
  func.func @transform_4(%arg0: i32) -> (i32, i32) {
    %c0_i32 = arith.constant 0 : i32
    %c0_i32_0 = arith.constant 0 : i32
    %c0_i32_1 = arith.constant 0 : i32
    return %c0_i32, %c0_i32_0 : i32, i32
  }
  func.func @transform_5(%arg0: i32) -> (i32, i32) {
    %c0_i32 = arith.constant 0 : i32
    %c0_i32_0 = arith.constant 0 : i32
    %c0_i32_1 = arith.constant 0 : i32
    return %c0_i32, %c0_i32_0 : i32, i32
  }
  func.func @transform_6(%arg0: i32) -> (i32, i32) {
    %c0_i32 = arith.constant 0 : i32
    %c0_i32_0 = arith.constant 0 : i32
    %c0_i32_1 = arith.constant 0 : i32
    return %c0_i32, %c0_i32_0 : i32, i32
  }
  func.func @transform_7(%arg0: i32) -> (i32, i32) {
    %c0_i32 = arith.constant 0 : i32
    %c0_i32_0 = arith.constant 0 : i32
    %c0_i32_1 = arith.constant 0 : i32
    return %c0_i32, %c0_i32_0 : i32, i32
  }
  func.func @transform_8(%arg0: i32) -> (i32, i32) {
    %c0_i32 = arith.constant 0 : i32
    %c0_i32_0 = arith.constant 0 : i32
    %c0_i32_1 = arith.constant 0 : i32
    return %c0_i32, %c0_i32_0 : i32, i32
  }
  func.func @transform_9(%arg0: i32) -> (i32, i32) {
    %c0_i32 = arith.constant 0 : i32
    %c0_i32_0 = arith.constant 0 : i32
    %c0_i32_1 = arith.constant 0 : i32
    return %c0_i32, %c0_i32_0 : i32, i32
  }
  func.func @transform_10(%arg0: i32) -> (i32, i32) {
    %c0_i32 = arith.constant 0 : i32
    %c0_i32_0 = arith.constant 0 : i32
    %c0_i32_1 = arith.constant 0 : i32
    return %c0_i32, %c0_i32_0 : i32, i32
  }
  func.func @transform_11(%arg0: i32) -> (i32, i32) {
    %c0_i32 = arith.constant 0 : i32
    %c0_i32_0 = arith.constant 0 : i32
    %c0_i32_1 = arith.constant 0 : i32
    return %c0_i32, %c0_i32_0 : i32, i32
  }
  func.func @transform_12(%arg0: i32) -> (i32, i32) {
    %c0_i32 = arith.constant 0 : i32
    %c0_i32_0 = arith.constant 0 : i32
    %c0_i32_1 = arith.constant 0 : i32
    return %c0_i32, %c0_i32_0 : i32, i32
  }
  func.func @transform_13(%arg0: i32) -> (i32, i32) {
    %c0_i32 = arith.constant 0 : i32
    %c0_i32_0 = arith.constant 0 : i32
    %c0_i32_1 = arith.constant 0 : i32
    return %c0_i32, %c0_i32_0 : i32, i32
  }
  func.func @transform_14(%arg0: i32) -> (i32, i32) {
    %c0_i32 = arith.constant 0 : i32
    %c0_i32_0 = arith.constant 0 : i32
    %c0_i32_1 = arith.constant 0 : i32
    return %c0_i32, %c0_i32_0 : i32, i32
  }
  func.func @transform_15(%arg0: i32) -> (i32, i32) {
    %c0_i32 = arith.constant 0 : i32
    %c0_i32_0 = arith.constant 0 : i32
    %c0_i32_1 = arith.constant 0 : i32
    return %c0_i32, %c0_i32_0 : i32, i32
  }
  func.func @transform_16(%arg0: i32) -> (i32, i32) {
    %c0_i32 = arith.constant 0 : i32
    %c0_i32_0 = arith.constant 0 : i32
    %c0_i32_1 = arith.constant 0 : i32
    return %c0_i32, %c0_i32_0 : i32, i32
  }
  func.func @transform_17(%arg0: i32) -> (i32, i32) {
    %c0_i32 = arith.constant 0 : i32
    %c0_i32_0 = arith.constant 0 : i32
    %c0_i32_1 = arith.constant 0 : i32
    return %c0_i32, %c0_i32_0 : i32, i32
  }
  func.func @transform_18(%arg0: i32) -> (i32, i32) {
    %c0_i32 = arith.constant 0 : i32
    %c0_i32_0 = arith.constant 0 : i32
    %c0_i32_1 = arith.constant 0 : i32
    return %c0_i32, %c0_i32_0 : i32, i32
  }
  func.func @transform_19(%arg0: i32) -> (i32, i32) {
    %c0_i32 = arith.constant 0 : i32
    %c0_i32_0 = arith.constant 0 : i32
    %c0_i32_1 = arith.constant 0 : i32
    return %c0_i32, %c0_i32_0 : i32, i32
  }
  func.func @transform_20(%arg0: i32) -> (i32, i32, i32) {
    %c0_i32 = arith.constant 0 : i32
    %c0_i32_0 = arith.constant 0 : i32
    %c0_i32_1 = arith.constant 0 : i32
    return %arg0, %c0_i32, %c0_i32_0 : i32, i32, i32
  }
}

</mosaic_0001>

<llo_original>
// kernel: tpu_custom_call.1
$region0: #{tpu_custom_call.1}
  #allocation0 [shape = 'u32[]', space=smem, size = 0x4, offset = 0x4, fixed_abs, tag = 'smem constant byte address 0x4 - core index']
  #allocation1 [shape = 'u32[72,128]{1,0:T(1,128)}', space=vmem, size = 0x9000, scoped, tag = 'internal scratch']
  %s0 = inlined_call_operand.vmem [shape: f32[2,64,256], index: 0, kind: input, shape index: {}]
  %s1 = inlined_call_operand.vmem [shape: f32[256,1], index: 1, kind: input, shape index: {}]
  %s2 = inlined_call_operand.hbm [shape: f32[256,256], index: 2, kind: input, shape index: {}]
  %s3 = inlined_call_operand.hbm [shape: f32[256,256], index: 3, kind: input, shape index: {}]
  %s4 = inlined_call_operand.hbm [shape: f32[256,256], index: 4, kind: input, shape index: {}]
  %s5 = inlined_call_operand.vmem [shape: f32[1,256], index: 5, kind: input, shape index: {}]
  %s6 = inlined_call_operand.vmem [shape: f32[1,256], index: 6, kind: input, shape index: {}]
  %s7 = inlined_call_operand.vmem [shape: f32[1,256], index: 7, kind: input, shape index: {}]
  %s8 = inlined_call_operand.hbm [shape: f32[256,128], index: 8, kind: input, shape index: {}]
  %s9 = inlined_call_operand.vmem [shape: f32[1,128], index: 9, kind: input, shape index: {}]
  %s10 = inlined_call_operand.vmem [shape: f32[1,128], index: 10, kind: input, shape index: {}]
  %s11 = inlined_call_operand.vmem [shape: f32[1,128], index: 11, kind: input, shape index: {}]
  %s12 = inlined_call_operand.hbm [shape: f32[128,128], index: 12, kind: input, shape index: {}]
  %s13 = inlined_call_operand.vmem [shape: f32[1,128], index: 13, kind: input, shape index: {}]
  %s14 = inlined_call_operand.vmem [shape: f32[1,128], index: 14, kind: input, shape index: {}]
  %s15 = inlined_call_operand.vmem [shape: f32[1,128], index: 15, kind: input, shape index: {}]
  %s16 = inlined_call_operand.hbm [shape: f32[128,128], index: 16, kind: input, shape index: {}]
  %s17 = inlined_call_operand.vmem [shape: f32[1,128], index: 17, kind: input, shape index: {}]
  %s18 = inlined_call_operand.vmem [shape: f32[1,128], index: 18, kind: input, shape index: {}]
  %s19 = inlined_call_operand.vmem [shape: f32[1,128], index: 19, kind: input, shape index: {}]
  %s20 = inlined_call_operand.hbm [shape: f32[2,1,128], index: 20, kind: output, shape index: {}]
  %s21 = sld [smem:[#allocation0]]
  $region137: #{tpu_custom_call.1} parent=0
    _
  %s23 = ssub.s32 1, %s21
  %s24 = scalar_select 0, %s23, %s21
  $region1: #{tpu_custom_call.1} parent=0
    #allocation2 [shape = 'u8[262144]{0}', space=vmem, size = 0x40000, scoped, tag = 'input window, operand 2, single buffered']
    #allocation3 [shape = 's32[2]{0}', space=sflag, size = 0x8, scoped, tag = 'scoped memory for tpu_custom_call.1']
    #allocation4 [shape = 's32[2]{0}', space=sflag, size = 0x8, scoped, tag = 'scoped memory for tpu_custom_call.1']
    #allocation5 [shape = 'u8[262144]{0}', space=vmem, size = 0x40000, scoped, tag = 'input window, operand 3, single buffered']
    #allocation6 [shape = 's32[1]{0}', space=sflag, size = 0x4, scoped, tag = 'scoped memory for tpu_custom_call.1']
    #allocation7 [shape = 'u8[262144]{0}', space=vmem, size = 0x40000, scoped, tag = 'input window, operand 4, single buffered']
    #allocation8 [shape = 'u8[131072]{0}', space=vmem, size = 0x20000, scoped, tag = 'input window, operand 8, single buffered']
    #allocation9 [shape = 's32[1]{0}', space=sflag, size = 0x4, scoped, tag = 'scoped memory for tpu_custom_call.1']
    #allocation10 [shape = 'u8[65536]{0}', space=vmem, size = 0x10000, scoped, tag = 'input window, operand 12, single buffered']
    #allocation11 [shape = 'u8[65536]{0}', space=vmem, size = 0x10000, scoped, tag = 'input window, operand 16, single buffered']
    #allocation12 [shape = 's32[1]{0}', space=sflag, size = 0x4, scoped, tag = 'scoped memory for tpu_custom_call.1']
    #allocation13 [shape = 'u8[1024]{0}', space=vmem, size = 0x400, scoped, tag = 'output window, operand 0']
    %25 = vsyncpa [#allocation3], 0
    %26 = vsyncpa [#allocation6], 0
    %27 = vsyncpa [#allocation9], 0
    %28 = vsyncpa [#allocation12], 0
    %29 = vsyncpa [#allocation4], 0
    %s30 = scalar_lea.sflag [#allocation4], 1
    %31 = vsyncpa %s30, 0
    loop: start=0, step=1, limit=4
    $region2: #{tpu_custom_call.1} parent=1 // loop_pre_header
      _
    $region3: #{tpu_custom_call.1} parent=1 // loop_header
      %s33 = sphi 0, %s37
      %p34 = scmp.ge.s32.totalorder %s33, 4
      %s43 = sphi 0, %s45
      %s46 = sphi 0, %s43
      %s47 = sphi 0, %s46
      %s63 = sphi 0, %s47
      %s67 = sphi 0, %s67
      %s69 = sphi 0, %s67
      %s70 = sphi 0, %s69
      %s84 = sphi 0, %s70
      %s88 = sphi 0, %s88
      %s90 = sphi 0, %s88
      %s91 = sphi 0, %s90
      %s105 = sphi 0, %s91
      %s109 = sphi 0, %s109
      %s111 = sphi 0, %s109
      %s112 = sphi 0, %s111
      %s126 = sphi 0, %s112
      %s130 = sphi 0, %s130
      %s132 = sphi 0, %s130
      %s133 = sphi 0, %s132
      %s147 = sphi 0, %s133
      %s151 = sphi 0, %s151
      %s153 = sphi 0, %s151
      %s154 = sphi 0, %s153
      %s168 = sphi 0, %s154
      %s172 = sphi 0, %s172
      %s174 = sphi 0, %s172
      %s175 = sphi 0, %s174
      %s189 = sphi 0, %s175
      %s193 = sphi 0, %s193
      %s195 = sphi 0, %s193
      %s196 = sphi 0, %s195
      %s210 = sphi 0, %s196
      %s214 = sphi 0, %s214
      %s216 = sphi 0, %s214
      %s217 = sphi 0, %s216
      %s231 = sphi 0, %s217
      %s235 = sphi 0, %s235
      %s237 = sphi 0, %s235
      %s238 = sphi 0, %s237
      %s252 = sphi 0, %s238
      %s256 = sphi 0, %s256
      %s258 = sphi 0, %s256
      %s259 = sphi 0, %s258
      %s273 = sphi 0, %s259
      %s277 = sphi 0, %s277
      %s279 = sphi 0, %s277
      %s280 = sphi 0, %s279
      %s294 = sphi 0, %s280
      %s298 = sphi 0, %s298
      %s300 = sphi 0, %s298
      %s301 = sphi 0, %s300
      %s315 = sphi 0, %s301
      %s319 = sphi 0, %s319
      %s321 = sphi 0, %s319
      %s322 = sphi 0, %s321
      %s336 = sphi 0, %s322
      %s340 = sphi 0, %s340
      %s342 = sphi 0, %s340
      %s343 = sphi 0, %s342
      %s357 = sphi 0, %s343
      %s361 = sphi 0, %s361
      %s363 = sphi 0, %s361
      %s364 = sphi 0, %s363
      %s378 = sphi 0, %s364
      %s382 = sphi 0, %s382
      %s384 = sphi 0, %s382
      %s385 = sphi 0, %s384
      %s399 = sphi 0, %s385
      %s403 = sphi 0, %s403
      %s405 = sphi 0, %s403
      %s406 = sphi 0, %s405
      %s420 = sphi 0, %s406
      %s424 = sphi 0, %s424
      %s426 = sphi 0, %s424
      %s427 = sphi 0, %s426
      %s441 = sphi 0, %s427
      %s445 = sphi 0, %s445
      %s447 = sphi 0, %s445
      %s448 = sphi 0, %s447
      %s462 = sphi 0, %s448
      %s468 = sphi 0, %s470
      %s471 = sphi 0, %s468
      %s472 = sphi 0, %s471
      %s488 = sphi 0, %s472
    $region4: #{tpu_custom_call.1} parent=1 // loop_header_branch
      %36 = sbr.rel (%p34) target = $region8
    $region5: #{tpu_custom_call.1} parent=1 // loop_body
      %s38 = ssub.s32 %s33, 1
      %s39 = ssub.s32 %s33, 2
      %s40 = sadd.s32 %s33, 1
      %s41 = ssub.s32 %s33, %s40
      %p42 = scmp.eq.s32.totalorder %s41, 0
      %s44 = sadd.s32 %s43, 1
      %s45 = scalar_select %p42, %s43, %s44
      %p48 = pneg %p42
      %p49 = scmp.eq.s32.totalorder %s33, 1
      %p50 = por %p48, %p49
      %p51 = scmp.ne.s32.totalorder %s43, %s46
      %p52 = scmp.eq.s32.totalorder %s33, 0
      %p53 = por %p51, %p52
      %p54 = scmp.ne.s32.totalorder %s43, %s46
      %p55 = scmp.eq.s32.totalorder %s38, 1
      %p56 = por %p54, %p55
      %p57 = scmp.ne.s32.totalorder %s46, %s47
      %p58 = scmp.eq.s32.totalorder %s38, 0
      %p59 = por %p57, %p58
      %p60 = scmp.ne.s32.totalorder %s46, %s47
      %p61 = scmp.eq.s32.totalorder %s39, 1
      %p62 = por %p60, %p61
      %p64 = scmp.ne.s32.totalorder %s47, %s63
      %p65 = scmp.eq.s32.totalorder %s39, 0
      %p66 = por %p64, %p65
      %s68 = sadd.s32 %s67, 1
      %p71 = scmp.eq.s32.totalorder %s33, 1
      %p72 = scmp.ne.s32.totalorder %s67, %s69
      %p73 = scmp.eq.s32.totalorder %s33, 0
      %p74 = por %p72, %p73
      %p75 = scmp.ne.s32.totalorder %s67, %s69
      %p76 = scmp.eq.s32.totalorder %s38, 1
      %p77 = por %p75, %p76
      %p78 = scmp.ne.s32.totalorder %s69, %s70
      %p79 = scmp.eq.s32.totalorder %s38, 0
      %p80 = por %p78, %p79
      %p81 = scmp.ne.s32.totalorder %s69, %s70
      %p82 = scmp.eq.s32.totalorder %s39, 1
      %p83 = por %p81, %p82
      %p85 = scmp.ne.s32.totalorder %s70, %s84
      %p86 = scmp.eq.s32.totalorder %s39, 0
      %p87 = por %p85, %p86
      %s89 = sadd.s32 %s88, 1
      %p92 = scmp.eq.s32.totalorder %s33, 1
      %p93 = scmp.ne.s32.totalorder %s88, %s90
      %p94 = scmp.eq.s32.totalorder %s33, 0
      %p95 = por %p93, %p94
      %p96 = scmp.ne.s32.totalorder %s88, %s90
      %p97 = scmp.eq.s32.totalorder %s38, 1
      %p98 = por %p96, %p97
      %p99 = scmp.ne.s32.totalorder %s90, %s91
      %p100 = scmp.eq.s32.totalorder %s38, 0
      %p101 = por %p99, %p100
      %p102 = scmp.ne.s32.totalorder %s90, %s91
      %p103 = scmp.eq.s32.totalorder %s39, 1
      %p104 = por %p102, %p103
      %p106 = scmp.ne.s32.totalorder %s91, %s105
      %p107 = scmp.eq.s32.totalorder %s39, 0
      %p108 = por %p106, %p107
      %s110 = sadd.s32 %s109, 1
      %p113 = scmp.eq.s32.totalorder %s33, 1
      %p114 = scmp.ne.s32.totalorder %s109, %s111
      %p115 = scmp.eq.s32.totalorder %s33, 0
      %p116 = por %p114, %p115
      %p117 = scmp.ne.s32.totalorder %s109, %s111
      %p118 = scmp.eq.s32.totalorder %s38, 1
      %p119 = por %p117, %p118
      %p120 = scmp.ne.s32.totalorder %s111, %s112
      %p121 = scmp.eq.s32.totalorder %s38, 0
      %p122 = por %p120, %p121
      %p123 = scmp.ne.s32.totalorder %s111, %s112
      %p124 = scmp.eq.s32.totalorder %s39, 1
      %p125 = por %p123, %p124
      %p127 = scmp.ne.s32.totalorder %s112, %s126
      %p128 = scmp.eq.s32.totalorder %s39, 0
      %p129 = por %p127, %p128
      %s131 = sadd.s32 %s130, 1
      %p134 = scmp.eq.s32.totalorder %s33, 1
      %p135 = scmp.ne.s32.totalorder %s130, %s132
      %p136 = scmp.eq.s32.totalorder %s33, 0
      %p137 = por %p135, %p136
      %p138 = scmp.ne.s32.totalorder %s130, %s132
      %p139 = scmp.eq.s32.totalorder %s38, 1
      %p140 = por %p138, %p139
      %p141 = scmp.ne.s32.totalorder %s132, %s133
      %p142 = scmp.eq.s32.totalorder %s38, 0
      %p143 = por %p141, %p142
      %p144 = scmp.ne.s32.totalorder %s132, %s133
      %p145 = scmp.eq.s32.totalorder %s39, 1
      %p146 = por %p144, %p145
      %p148 = scmp.ne.s32.totalorder %s133, %s147
      %p149 = scmp.eq.s32.totalorder %s39, 0
      %p150 = por %p148, %p149
      %s152 = sadd.s32 %s151, 1
      %p155 = scmp.eq.s32.totalorder %s33, 1
      %p156 = scmp.ne.s32.totalorder %s151, %s153
      %p157 = scmp.eq.s32.totalorder %s33, 0
      %p158 = por %p156, %p157
      %p159 = scmp.ne.s32.totalorder %s151, %s153
      %p160 = scmp.eq.s32.totalorder %s38, 1
      %p161 = por %p159, %p160
      %p162 = scmp.ne.s32.totalorder %s153, %s154
      %p163 = scmp.eq.s32.totalorder %s38, 0
      %p164 = por %p162, %p163
      %p165 = scmp.ne.s32.totalorder %s153, %s154
      %p166 = scmp.eq.s32.totalorder %s39, 1
      %p167 = por %p165, %p166
      %p169 = scmp.ne.s32.totalorder %s154, %s168
      %p170 = scmp.eq.s32.totalorder %s39, 0
      %p171 = por %p169, %p170
      %s173 = sadd.s32 %s172, 1
      %p176 = scmp.eq.s32.totalorder %s33, 1
      %p177 = scmp.ne.s32.totalorder %s172, %s174
      %p178 = scmp.eq.s32.totalorder %s33, 0
      %p179 = por %p177, %p178
      %p180 = scmp.ne.s32.totalorder %s172, %s174
      %p181 = scmp.eq.s32.totalorder %s38, 1
      %p182 = por %p180, %p181
      %p183 = scmp.ne.s32.totalorder %s174, %s175
      %p184 = scmp.eq.s32.totalorder %s38, 0
      %p185 = por %p183, %p184
      %p186 = scmp.ne.s32.totalorder %s174, %s175
      %p187 = scmp.eq.s32.totalorder %s39, 1
      %p188 = por %p186, %p187
      %p190 = scmp.ne.s32.totalorder %s175, %s189
      %p191 = scmp.eq.s32.totalorder %s39, 0
      %p192 = por %p190, %p191
      %s194 = sadd.s32 %s193, 1
      %p197 = scmp.eq.s32.totalorder %s33, 1
      %p198 = scmp.ne.s32.totalorder %s193, %s195
      %p199 = scmp.eq.s32.totalorder %s33, 0
      %p200 = por %p198, %p199
      %p201 = scmp.ne.s32.totalorder %s193, %s195
      %p202 = scmp.eq.s32.totalorder %s38, 1
      %p203 = por %p201, %p202
      %p204 = scmp.ne.s32.totalorder %s195, %s196
      %p205 = scmp.eq.s32.totalorder %s38, 0
      %p206 = por %p204, %p205
      %p207 = scmp.ne.s32.totalorder %s195, %s196
      %p208 = scmp.eq.s32.totalorder %s39, 1
      %p209 = por %p207, %p208
      %p211 = scmp.ne.s32.totalorder %s196, %s210
      %p212 = scmp.eq.s32.totalorder %s39, 0
      %p213 = por %p211, %p212
      %s215 = sadd.s32 %s214, 1
      %p218 = scmp.eq.s32.totalorder %s33, 1
      %p219 = scmp.ne.s32.totalorder %s214, %s216
      %p220 = scmp.eq.s32.totalorder %s33, 0
      %p221 = por %p219, %p220
      %p222 = scmp.ne.s32.totalorder %s214, %s216
      %p223 = scmp.eq.s32.totalorder %s38, 1
      %p224 = por %p222, %p223
      %p225 = scmp.ne.s32.totalorder %s216, %s217
      %p226 = scmp.eq.s32.totalorder %s38, 0
      %p227 = por %p225, %p226
      %p228 = scmp.ne.s32.totalorder %s216, %s217
      %p229 = scmp.eq.s32.totalorder %s39, 1
      %p230 = por %p228, %p229
      %p232 = scmp.ne.s32.totalorder %s217, %s231
      %p233 = scmp.eq.s32.totalorder %s39, 0
      %p234 = por %p232, %p233
      %s236 = sadd.s32 %s235, 1
      %p239 = scmp.eq.s32.totalorder %s33, 1
      %p240 = scmp.ne.s32.totalorder %s235, %s237
      %p241 = scmp.eq.s32.totalorder %s33, 0
      %p242 = por %p240, %p241
      %p243 = scmp.ne.s32.totalorder %s235, %s237
      %p244 = scmp.eq.s32.totalorder %s38, 1
      %p245 = por %p243, %p244
      %p246 = scmp.ne.s32.totalorder %s237, %s238
      %p247 = scmp.eq.s32.totalorder %s38, 0
      %p248 = por %p246, %p247
      %p249 = scmp.ne.s32.totalorder %s237, %s238
      %p250 = scmp.eq.s32.totalorder %s39, 1
      %p251 = por %p249, %p250
      %p253 = scmp.ne.s32.totalorder %s238, %s252
      %p254 = scmp.eq.s32.totalorder %s39, 0
      %p255 = por %p253, %p254
      %s257 = sadd.s32 %s256, 1
      %p260 = scmp.eq.s32.totalorder %s33, 1
      %p261 = scmp.ne.s32.totalorder %s256, %s258
      %p262 = scmp.eq.s32.totalorder %s33, 0
      %p263 = por %p261, %p262
      %p264 = scmp.ne.s32.totalorder %s256, %s258
      %p265 = scmp.eq.s32.totalorder %s38, 1
      %p266 = por %p264, %p265
      %p267 = scmp.ne.s32.totalorder %s258, %s259
      %p268 = scmp.eq.s32.totalorder %s38, 0
      %p269 = por %p267, %p268
      %p270 = scmp.ne.s32.totalorder %s258, %s259
      %p271 = scmp.eq.s32.totalorder %s39, 1
      %p272 = por %p270, %p271
      %p274 = scmp.ne.s32.totalorder %s259, %s273
      %p275 = scmp.eq.s32.totalorder %s39, 0
      %p276 = por %p274, %p275
      %s278 = sadd.s32 %s277, 1
      %p281 = scmp.eq.s32.totalorder %s33, 1
      %p282 = scmp.ne.s32.totalorder %s277, %s279
      %p283 = scmp.eq.s32.totalorder %s33, 0
      %p284 = por %p282, %p283
      %p285 = scmp.ne.s32.totalorder %s277, %s279
      %p286 = scmp.eq.s32.totalorder %s38, 1
      %p287 = por %p285, %p286
      %p288 = scmp.ne.s32.totalorder %s279, %s280
      %p289 = scmp.eq.s32.totalorder %s38, 0
      %p290 = por %p288, %p289
      %p291 = scmp.ne.s32.totalorder %s279, %s280
      %p292 = scmp.eq.s32.totalorder %s39, 1
      %p293 = por %p291, %p292
      %p295 = scmp.ne.s32.totalorder %s280, %s294
      %p296 = scmp.eq.s32.totalorder %s39, 0
      %p297 = por %p295, %p296
      %s299 = sadd.s32 %s298, 1
      %p302 = scmp.eq.s32.totalorder %s33, 1
      %p303 = scmp.ne.s32.totalorder %s298, %s300
      %p304 = scmp.eq.s32.totalorder %s33, 0
      %p305 = por %p303, %p304
      %p306 = scmp.ne.s32.totalorder %s298, %s300
      %p307 = scmp.eq.s32.totalorder %s38, 1
      %p308 = por %p306, %p307
      %p309 = scmp.ne.s32.totalorder %s300, %s301
      %p310 = scmp.eq.s32.totalorder %s38, 0
      %p311 = por %p309, %p310
      %p312 = scmp.ne.s32.totalorder %s300, %s301
      %p313 = scmp.eq.s32.totalorder %s39, 1
      %p314 = por %p312, %p313
      %p316 = scmp.ne.s32.totalorder %s301, %s315
      %p317 = scmp.eq.s32.totalorder %s39, 0
      %p318 = por %p316, %p317
      %s320 = sadd.s32 %s319, 1
      %p323 = scmp.eq.s32.totalorder %s33, 1
      %p324 = scmp.ne.s32.totalorder %s319, %s321
      %p325 = scmp.eq.s32.totalorder %s33, 0
      %p326 = por %p324, %p325
      %p327 = scmp.ne.s32.totalorder %s319, %s321
      %p328 = scmp.eq.s32.totalorder %s38, 1
      %p329 = por %p327, %p328
      %p330 = scmp.ne.s32.totalorder %s321, %s322
      %p331 = scmp.eq.s32.totalorder %s38, 0
      %p332 = por %p330, %p331
      %p333 = scmp.ne.s32.totalorder %s321, %s322
      %p334 = scmp.eq.s32.totalorder %s39, 1
      %p335 = por %p333, %p334
      %p337 = scmp.ne.s32.totalorder %s322, %s336
      %p338 = scmp.eq.s32.totalorder %s39, 0
      %p339 = por %p337, %p338
      %s341 = sadd.s32 %s340, 1
      %p344 = scmp.eq.s32.totalorder %s33, 1
      %p345 = scmp.ne.s32.totalorder %s340, %s342
      %p346 = scmp.eq.s32.totalorder %s33, 0
      %p347 = por %p345, %p346
      %p348 = scmp.ne.s32.totalorder %s340, %s342
      %p349 = scmp.eq.s32.totalorder %s38, 1
      %p350 = por %p348, %p349
      %p351 = scmp.ne.s32.totalorder %s342, %s343
      %p352 = scmp.eq.s32.totalorder %s38, 0
      %p353 = por %p351, %p352
      %p354 = scmp.ne.s32.totalorder %s342, %s343
      %p355 = scmp.eq.s32.totalorder %s39, 1
      %p356 = por %p354, %p355
      %p358 = scmp.ne.s32.totalorder %s343, %s357
      %p359 = scmp.eq.s32.totalorder %s39, 0
      %p360 = por %p358, %p359
      %s362 = sadd.s32 %s361, 1
      %p365 = scmp.eq.s32.totalorder %s33, 1
      %p366 = scmp.ne.s32.totalorder %s361, %s363
      %p367 = scmp.eq.s32.totalorder %s33, 0
      %p368 = por %p366, %p367
      %p369 = scmp.ne.s32.totalorder %s361, %s363
      %p370 = scmp.eq.s32.totalorder %s38, 1
      %p371 = por %p369, %p370
      %p372 = scmp.ne.s32.totalorder %s363, %s364
      %p373 = scmp.eq.s32.totalorder %s38, 0
      %p374 = por %p372, %p373
      %p375 = scmp.ne.s32.totalorder %s363, %s364
      %p376 = scmp.eq.s32.totalorder %s39, 1
      %p377 = por %p375, %p376
      %p379 = scmp.ne.s32.totalorder %s364, %s378
      %p380 = scmp.eq.s32.totalorder %s39, 0
      %p381 = por %p379, %p380
      %s383 = sadd.s32 %s382, 1
      %p386 = scmp.eq.s32.totalorder %s33, 1
      %p387 = scmp.ne.s32.totalorder %s382, %s384
      %p388 = scmp.eq.s32.totalorder %s33, 0
      %p389 = por %p387, %p388
      %p390 = scmp.ne.s32.totalorder %s382, %s384
      %p391 = scmp.eq.s32.totalorder %s38, 1
      %p392 = por %p390, %p391
      %p393 = scmp.ne.s32.totalorder %s384, %s385
      %p394 = scmp.eq.s32.totalorder %s38, 0
      %p395 = por %p393, %p394
      %p396 = scmp.ne.s32.totalorder %s384, %s385
      %p397 = scmp.eq.s32.totalorder %s39, 1
      %p398 = por %p396, %p397
      %p400 = scmp.ne.s32.totalorder %s385, %s399
      %p401 = scmp.eq.s32.totalorder %s39, 0
      %p402 = por %p400, %p401
      %s404 = sadd.s32 %s403, 1
      %p407 = scmp.eq.s32.totalorder %s33, 1
      %p408 = scmp.ne.s32.totalorder %s403, %s405
      %p409 = scmp.eq.s32.totalorder %s33, 0
      %p410 = por %p408, %p409
      %p411 = scmp.ne.s32.totalorder %s403, %s405
      %p412 = scmp.eq.s32.totalorder %s38, 1
      %p413 = por %p411, %p412
      %p414 = scmp.ne.s32.totalorder %s405, %s406
      %p415 = scmp.eq.s32.totalorder %s38, 0
      %p416 = por %p414, %p415
      %p417 = scmp.ne.s32.totalorder %s405, %s406
      %p418 = scmp.eq.s32.totalorder %s39, 1
      %p419 = por %p417, %p418
      %p421 = scmp.ne.s32.totalorder %s406, %s420
      %p422 = scmp.eq.s32.totalorder %s39, 0
      %p423 = por %p421, %p422
      %s425 = sadd.s32 %s424, 1
      %p428 = scmp.eq.s32.totalorder %s33, 1
      %p429 = scmp.ne.s32.totalorder %s424, %s426
      %p430 = scmp.eq.s32.totalorder %s33, 0
      %p431 = por %p429, %p430
      %p432 = scmp.ne.s32.totalorder %s424, %s426
      %p433 = scmp.eq.s32.totalorder %s38, 1
      %p434 = por %p432, %p433
      %p435 = scmp.ne.s32.totalorder %s426, %s427
      %p436 = scmp.eq.s32.totalorder %s38, 0
      %p437 = por %p435, %p436
      %p438 = scmp.ne.s32.totalorder %s426, %s427
      %p439 = scmp.eq.s32.totalorder %s39, 1
      %p440 = por %p438, %p439
      %p442 = scmp.ne.s32.totalorder %s427, %s441
      %p443 = scmp.eq.s32.totalorder %s39, 0
      %p444 = por %p442, %p443
      %s446 = sadd.s32 %s445, 1
      %p449 = scmp.eq.s32.totalorder %s33, 1
      %p450 = scmp.ne.s32.totalorder %s445, %s447
      %p451 = scmp.eq.s32.totalorder %s33, 0
      %p452 = por %p450, %p451
      %p453 = scmp.ne.s32.totalorder %s445, %s447
      %p454 = scmp.eq.s32.totalorder %s38, 1
      %p455 = por %p453, %p454
      %p456 = scmp.ne.s32.totalorder %s447, %s448
      %p457 = scmp.eq.s32.totalorder %s38, 0
      %p458 = por %p456, %p457
      %p459 = scmp.ne.s32.totalorder %s447, %s448
      %p460 = scmp.eq.s32.totalorder %s39, 1
      %p461 = por %p459, %p460
      %p463 = scmp.ne.s32.totalorder %s448, %s462
      %p464 = scmp.eq.s32.totalorder %s39, 0
      %p465 = por %p463, %p464
      %s466 = ssub.s32 %s33, %s40
      %p467 = scmp.eq.s32.totalorder %s466, 0
      %s469 = sadd.s32 %s468, 1
      %s470 = scalar_select %p467, %s468, %s469
      %p473 = pneg %p467
      %p474 = scmp.eq.s32.totalorder %s33, 1
      %p475 = por %p473, %p474
      %p476 = scmp.ne.s32.totalorder %s468, %s471
      %p477 = scmp.eq.s32.totalorder %s33, 0
      %p478 = por %p476, %p477
      %p479 = scmp.ne.s32.totalorder %s468, %s471
      %p480 = scmp.eq.s32.totalorder %s38, 1
      %p481 = por %p479, %p480
      %p482 = scmp.ne.s32.totalorder %s471, %s472
      %p483 = scmp.eq.s32.totalorder %s38, 0
      %p484 = por %p482, %p483
      %p485 = scmp.ne.s32.totalorder %s471, %s472
      %p486 = scmp.eq.s32.totalorder %s39, 1
      %p487 = por %p485, %p486
      %p489 = scmp.ne.s32.totalorder %s472, %s488
      %p490 = scmp.eq.s32.totalorder %s39, 0
      %p491 = por %p489, %p490
      %p492 = scmp.le.s32.totalorder 1, %s33
      %p493 = scmp.lt.s32.totalorder %s33, 3
      %p494 = pnand %p492, %p493
      %p495 = pneg %p494
      // Predicated region
      $region9: #{tpu_custom_call.1} parent=5 // pred_check
        _
      $region10: #{tpu_custom_call.1} parent=5 // pred_check_branch
        %497 = sbr.rel (%p494) target = $region12
      $region11: #{tpu_custom_call.1} parent=5 // pred_region
        %s498 = ssub.s32 %s33, 1
        // Predicated region
        $region13: #{tpu_custom_call.1} parent=11 // pred_check
          %p499 = pneg %p80
        $region14: #{tpu_custom_call.1} parent=11 // pred_check_branch
          %501 = sbr.rel (%p499) target = $region16
        $region15: #{tpu_custom_call.1} parent=11 // pred_region
          _
        $region16: #{tpu_custom_call.1} parent=11 // pred_fallthru
          _
        // Predicated region
        $region17: #{tpu_custom_call.1} parent=11 // pred_check
          %p502 = pneg %p101
        $region18: #{tpu_custom_call.1} parent=11 // pred_check_branch
          %504 = sbr.rel (%p502) target = $region20
        $region19: #{tpu_custom_call.1} parent=11 // pred_region
          %506 = vsyncadd [#allocation3], 0
          %s507 = sshll.u32 %s2, 4
          %s508 = int_to_ptr.hbm [resolvable:$true] %s507
          %s509 = sshll.u32 [#allocation2], 4
          %s510 = int_to_ptr.vmem [resolvable:$true] %s509
          %515 = dma.hbm_to_vmem [thread:$0]  %s508, 8192, %s510, [#allocation3], 256, 256, 16
        $region20: #{tpu_custom_call.1} parent=11 // pred_fallthru
          _
        // Predicated region
        $region21: #{tpu_custom_call.1} parent=11 // pred_check
          %p516 = pneg %p122
        $region22: #{tpu_custom_call.1} parent=11 // pred_check_branch
          %518 = sbr.rel (%p516) target = $region24
        $region23: #{tpu_custom_call.1} parent=11 // pred_region
          %520 = vsyncadd [#allocation6], 0
          %s521 = sshll.u32 %s3, 4
          %s522 = int_to_ptr.hbm [resolvable:$true] %s521
          %s523 = sshll.u32 [#allocation5], 4
          %s524 = int_to_ptr.vmem [resolvable:$true] %s523
          %529 = dma.hbm_to_vmem [thread:$0]  %s522, 8192, %s524, [#allocation6], 256, 256, 16
        $region24: #{tpu_custom_call.1} parent=11 // pred_fallthru
          _
        // Predicated region
        $region25: #{tpu_custom_call.1} parent=11 // pred_check
          %p530 = pneg %p143
        $region26: #{tpu_custom_call.1} parent=11 // pred_check_branch
          %532 = sbr.rel (%p530) target = $region28
        $region27: #{tpu_custom_call.1} parent=11 // pred_region
          %534 = vsyncadd [#allocation6], 0
          %s535 = sshll.u32 %s4, 4
          %s536 = int_to_ptr.hbm [resolvable:$true] %s535
          %s537 = sshll.u32 [#allocation7], 4
          %s538 = int_to_ptr.vmem [resolvable:$true] %s537
          %543 = dma.hbm_to_vmem [thread:$0]  %s536, 8192, %s538, [#allocation6], 256, 256, 16
        $region28: #{tpu_custom_call.1} parent=11 // pred_fallthru
          _
        // Predicated region
        $region29: #{tpu_custom_call.1} parent=11 // pred_check
          %p544 = pneg %p164
        $region30: #{tpu_custom_call.1} parent=11 // pred_check_branch
          %546 = sbr.rel (%p544) target = $region32
        $region31: #{tpu_custom_call.1} parent=11 // pred_region
          _
        $region32: #{tpu_custom_call.1} parent=11 // pred_fallthru
          _
        // Predicated region
        $region33: #{tpu_custom_call.1} parent=11 // pred_check
          %p547 = pneg %p185
        $region34: #{tpu_custom_call.1} parent=11 // pred_check_branch
          %549 = sbr.rel (%p547) target = $region36
        $region35: #{tpu_custom_call.1} parent=11 // pred_region
          _
        $region36: #{tpu_custom_call.1} parent=11 // pred_fallthru
          _
        // Predicated region
        $region37: #{tpu_custom_call.1} parent=11 // pred_check
          %p550 = pneg %p206
        $region38: #{tpu_custom_call.1} parent=11 // pred_check_branch
          %552 = sbr.rel (%p550) target = $region40
        $region39: #{tpu_custom_call.1} parent=11 // pred_region
          _
        $region40: #{tpu_custom_call.1} parent=11 // pred_fallthru
          _
        // Predicated region
        $region41: #{tpu_custom_call.1} parent=11 // pred_check
          %p553 = pneg %p227
        $region42: #{tpu_custom_call.1} parent=11 // pred_check_branch
          %555 = sbr.rel (%p553) target = $region44
        $region43: #{tpu_custom_call.1} parent=11 // pred_region
          %557 = vsyncadd [#allocation9], 0
          %s558 = sshll.u32 %s8, 4
          %s559 = int_to_ptr.hbm [resolvable:$true] %s558
          %s560 = sshll.u32 [#allocation8], 4
          %s561 = int_to_ptr.vmem [resolvable:$true] %s560
          %566 = dma.hbm_to_vmem [thread:$0]  %s559, 4096, %s561, [#allocation9], 128, 128, 8
        $region44: #{tpu_custom_call.1} parent=11 // pred_fallthru
          _
        // Predicated region
        $region45: #{tpu_custom_call.1} parent=11 // pred_check
          %p567 = pneg %p248
        $region46: #{tpu_custom_call.1} parent=11 // pred_check_branch
          %569 = sbr.rel (%p567) target = $region48
        $region47: #{tpu_custom_call.1} parent=11 // pred_region
          _
        $region48: #{tpu_custom_call.1} parent=11 // pred_fallthru
          _
        // Predicated region
        $region49: #{tpu_custom_call.1} parent=11 // pred_check
          %p570 = pneg %p269
        $region50: #{tpu_custom_call.1} parent=11 // pred_check_branch
          %572 = sbr.rel (%p570) target = $region52
        $region51: #{tpu_custom_call.1} parent=11 // pred_region
          _
        $region52: #{tpu_custom_call.1} parent=11 // pred_fallthru
          _
        // Predicated region
        $region53: #{tpu_custom_call.1} parent=11 // pred_check
          %p573 = pneg %p290
        $region54: #{tpu_custom_call.1} parent=11 // pred_check_branch
          %575 = sbr.rel (%p573) target = $region56
        $region55: #{tpu_custom_call.1} parent=11 // pred_region
          _
        $region56: #{tpu_custom_call.1} parent=11 // pred_fallthru
          _
        // Predicated region
        $region57: #{tpu_custom_call.1} parent=11 // pred_check
          %p576 = pneg %p311
        $region58: #{tpu_custom_call.1} parent=11 // pred_check_branch
          %578 = sbr.rel (%p576) target = $region60
        $region59: #{tpu_custom_call.1} parent=11 // pred_region
          %580 = vsyncadd [#allocation9], 0
          %s581 = sshll.u32 %s12, 4
          %s582 = int_to_ptr.hbm [resolvable:$true] %s581
          %s583 = sshll.u32 [#allocation10], 4
          %s584 = int_to_ptr.vmem [resolvable:$true] %s583
          %589 = dma.hbm_to_vmem [thread:$0]  %s582, 2048, %s584, [#allocation9], 128, 128, 8
        $region60: #{tpu_custom_call.1} parent=11 // pred_fallthru
          _
        // Predicated region
        $region61: #{tpu_custom_call.1} parent=11 // pred_check
          %p590 = pneg %p332
        $region62: #{tpu_custom_call.1} parent=11 // pred_check_branch
          %592 = sbr.rel (%p590) target = $region64
        $region63: #{tpu_custom_call.1} parent=11 // pred_region
          _
        $region64: #{tpu_custom_call.1} parent=11 // pred_fallthru
          _
        // Predicated region
        $region65: #{tpu_custom_call.1} parent=11 // pred_check
          %p593 = pneg %p353
        $region66: #{tpu_custom_call.1} parent=11 // pred_check_branch
          %595 = sbr.rel (%p593) target = $region68
        $region67: #{tpu_custom_call.1} parent=11 // pred_region
          _
        $region68: #{tpu_custom_call.1} parent=11 // pred_fallthru
          _
        // Predicated region
        $region69: #{tpu_custom_call.1} parent=11 // pred_check
          %p596 = pneg %p374
        $region70: #{tpu_custom_call.1} parent=11 // pred_check_branch
          %598 = sbr.rel (%p596) target = $region72
        $region71: #{tpu_custom_call.1} parent=11 // pred_region
          _
        $region72: #{tpu_custom_call.1} parent=11 // pred_fallthru
          _
        // Predicated region
        $region73: #{tpu_custom_call.1} parent=11 // pred_check
          %p599 = pneg %p395
        $region74: #{tpu_custom_call.1} parent=11 // pred_check_branch
          %601 = sbr.rel (%p599) target = $region76
        $region75: #{tpu_custom_call.1} parent=11 // pred_region
          %603 = vsyncadd [#allocation12], 0
          %s604 = sshll.u32 %s16, 4
          %s605 = int_to_ptr.hbm [resolvable:$true] %s604
          %s606 = sshll.u32 [#allocation11], 4
          %s607 = int_to_ptr.vmem [resolvable:$true] %s606
          %612 = dma.hbm_to_vmem [thread:$0]  %s605, 2048, %s607, [#allocation12], 128, 128, 8
        $region76: #{tpu_custom_call.1} parent=11 // pred_fallthru
          _
        // Predicated region
        $region77: #{tpu_custom_call.1} parent=11 // pred_check
          %p613 = pneg %p416
        $region78: #{tpu_custom_call.1} parent=11 // pred_check_branch
          %615 = sbr.rel (%p613) target = $region80
        $region79: #{tpu_custom_call.1} parent=11 // pred_region
          _
        $region80: #{tpu_custom_call.1} parent=11 // pred_fallthru
          _
        // Predicated region
        $region81: #{tpu_custom_call.1} parent=11 // pred_check
          %p616 = pneg %p437
        $region82: #{tpu_custom_call.1} parent=11 // pred_check_branch
          %618 = sbr.rel (%p616) target = $region84
        $region83: #{tpu_custom_call.1} parent=11 // pred_region
          _
        $region84: #{tpu_custom_call.1} parent=11 // pred_fallthru
          _
        // Predicated region
        $region85: #{tpu_custom_call.1} parent=11 // pred_check
          %p619 = pneg %p458
        $region86: #{tpu_custom_call.1} parent=11 // pred_check_branch
          %621 = sbr.rel (%p619) target = $region88
        $region87: #{tpu_custom_call.1} parent=11 // pred_region
          _
        $region88: #{tpu_custom_call.1} parent=11 // pred_fallthru
          _
      $region12: #{tpu_custom_call.1} parent=5 // pred_fallthru
        _
      %p622 = scmp.lt.s32.totalorder %s33, 2
      // Predicated region
      $region89: #{tpu_custom_call.1} parent=5 // pred_check
        %p623 = pneg %p622
      $region90: #{tpu_custom_call.1} parent=5 // pred_check_branch
        %625 = sbr.rel (%p623) target = $region92
      $region91: #{tpu_custom_call.1} parent=5 // pred_region
        // Predicated region
        $region93: #{tpu_custom_call.1} parent=91 // pred_check
          %p626 = pneg %p53
        $region94: #{tpu_custom_call.1} parent=91 // pred_check_branch
          %628 = sbr.rel (%p626) target = $region96
        $region95: #{tpu_custom_call.1} parent=91 // pred_region
          %p629 = scmp.lt.s32.totalorder %s33, 1
          %s630 = scalar_select %p629, %s33, 1
          %s631 = smul.addr %s630, 16
          %s632 = smul.addr %s631, 8
          %s633 = scalar_lea.vmem %s0, %s632
        $region96: #{tpu_custom_call.1} parent=91 // pred_fallthru
          _
      $region92: #{tpu_custom_call.1} parent=5 // pred_fallthru
        _
      %p634 = scmp.le.s32.totalorder 1, %s33
      %p635 = scmp.lt.s32.totalorder %s33, 3
      %p636 = pnand %p634, %p635
      %p637 = pneg %p636
      // Predicated region
      $region97: #{tpu_custom_call.1} parent=5 // pred_check
        _
      $region98: #{tpu_custom_call.1} parent=5 // pred_check_branch
        %639 = sbr.rel (%p636) target = $region100
      $region99: #{tpu_custom_call.1} parent=5 // pred_region
        %s640 = ssub.s32 %s33, 1
        // Predicated region
        $region101: #{tpu_custom_call.1} parent=99 // pred_check
          %p641 = pneg %p101
        $region102: #{tpu_custom_call.1} parent=99 // pred_check_branch
          %643 = sbr.rel (%p641) target = $region104
        $region103: #{tpu_custom_call.1} parent=99 // pred_region
          %645 = dma.done [#allocation3], 8192
        $region104: #{tpu_custom_call.1} parent=99 // pred_fallthru
          _
        // Predicated region
        $region105: #{tpu_custom_call.1} parent=99 // pred_check
          %p646 = pneg %p122
        $region106: #{tpu_custom_call.1} parent=99 // pred_check_branch
          %648 = sbr.rel (%p646) target = $region108
        $region107: #{tpu_custom_call.1} parent=99 // pred_region
          %650 = dma.done [#allocation6], 8192
        $region108: #{tpu_custom_call.1} parent=99 // pred_fallthru
          _
        // Predicated region
        $region109: #{tpu_custom_call.1} parent=99 // pred_check
          %p651 = pneg %p143
        $region110: #{tpu_custom_call.1} parent=99 // pred_check_branch
          %653 = sbr.rel (%p651) target = $region112
        $region111: #{tpu_custom_call.1} parent=99 // pred_region
          %655 = dma.done [#allocation6], 8192
        $region112: #{tpu_custom_call.1} parent=99 // pred_fallthru
          _
        // Predicated region
        $region113: #{tpu_custom_call.1} parent=99 // pred_check
          %p656 = pneg %p227
        $region114: #{tpu_custom_call.1} parent=99 // pred_check_branch
          %658 = sbr.rel (%p656) target = $region116
        $region115: #{tpu_custom_call.1} parent=99 // pred_region
          %660 = dma.done [#allocation9], 4096
        $region116: #{tpu_custom_call.1} parent=99 // pred_fallthru
          _
        // Predicated region
        $region117: #{tpu_custom_call.1} parent=99 // pred_check
          %p661 = pneg %p311
        $region118: #{tpu_custom_call.1} parent=99 // pred_check_branch
          %663 = sbr.rel (%p661) target = $region120
        $region119: #{tpu_custom_call.1} parent=99 // pred_region
          %665 = dma.done [#allocation9], 2048
        $region120: #{tpu_custom_call.1} parent=99 // pred_fallthru
          _
        // Predicated region
        $region121: #{tpu_custom_call.1} parent=99 // pred_check
          %p666 = pneg %p395
        $region122: #{tpu_custom_call.1} parent=99 // pred_check_branch
          %668 = sbr.rel (%p666) target = $region124
        $region123: #{tpu_custom_call.1} parent=99 // pred_region
          %670 = dma.done [#allocation12], 2048
        $region124: #{tpu_custom_call.1} parent=99 // pred_fallthru
          _
        %p671 = scmp.lt.s32.totalorder %s38, 1
        %s672 = scalar_select %p671, %s38, 1
        %s673 = smul.addr %s672, 16
        %s674 = smul.addr %s673, 8
        %s675 = scalar_lea.vmem %s0, %s674
        %p676 = pneg %p59
        %p677 = pneg %p56
        %p678 = pneg %p80
        %p679 = pneg %p77
        %p680 = pneg %p101
        %p681 = pneg %p98
        %p682 = pneg %p122
        %p683 = pneg %p119
        %p684 = pneg %p143
        %p685 = pneg %p140
        %p686 = pneg %p164
        %p687 = pneg %p161
        %p688 = pneg %p185
        %p689 = pneg %p182
        %p690 = pneg %p206
        %p691 = pneg %p203
        %p692 = pneg %p227
        %p693 = pneg %p224
        %p694 = pneg %p248
        %p695 = pneg %p245
        %p696 = pneg %p269
        %p697 = pneg %p266
        %p698 = pneg %p290
        %p699 = pneg %p287
        %p700 = pneg %p311
        %p701 = pneg %p308
        %p702 = pneg %p332
        %p703 = pneg %p329
        %p704 = pneg %p353
        %p705 = pneg %p350
        %p706 = pneg %p374
        %p707 = pneg %p371
        %p708 = pneg %p395
        %p709 = pneg %p392
        %p710 = pneg %p416
        %p711 = pneg %p413
        %p712 = pneg %p437
        %p713 = pneg %p434
        %p714 = pneg %p458
        %p715 = pneg %p455
        %p716 = pneg %p484
        %p717 = pneg %p481
        %s718 = sand.u32 %s471, 1
        %s719 = scalar_lea.sflag [#allocation4], %s718
        %s720 = sand.u32 %s471, 1
        %s721 = scalar_lea.vmem [#allocation13], %s720
        %p722 = scmp.lt.s32.totalorder %s38, 1
        %s723 = scalar_select %p722, %s38, 1
        %s724 = smul.addr %s723, 16
        %s725 = smul.addr %s724, 8
        %s726 = scalar_lea.vmem %s0, %s725
        %v727 = vld [vmem:[%s726] sm:$0xff]
        %v728 = vld [vmem:[%s726 + $0x8] sm:$0xff]
        %v729 = vld [vmem:[%s726 + $0x10] sm:$0xff]
        %v730 = vld [vmem:[%s726 + $0x18] sm:$0xff]
        %v731 = vld [vmem:[%s726 + $0x20] sm:$0xff]
        %v732 = vld [vmem:[%s726 + $0x28] sm:$0xff]
        %v733 = vld [vmem:[%s726 + $0x30] sm:$0xff]
        %v734 = vld [vmem:[%s726 + $0x38] sm:$0xff]
        %v735 = vld [vmem:[%s726 + $0x40] sm:$0xff]
        %v736 = vld [vmem:[%s726 + $0x48] sm:$0xff]
        %v737 = vld [vmem:[%s726 + $0x50] sm:$0xff]
        %v738 = vld [vmem:[%s726 + $0x58] sm:$0xff]
        %v739 = vld [vmem:[%s726 + $0x60] sm:$0xff]
        %v740 = vld [vmem:[%s726 + $0x68] sm:$0xff]
        %v741 = vld [vmem:[%s726 + $0x70] sm:$0xff]
        %v742 = vld [vmem:[%s726 + $0x78] sm:$0xff]
        %v743 = vld [vmem:[#allocation2] sm:$0xff]
        %v744 = vld [vmem:[#allocation2 + $0x8] sm:$0xff]
        %v745 = vld [vmem:[#allocation2 + $0x10] sm:$0xff]
        %v746 = vld [vmem:[#allocation2 + $0x18] sm:$0xff]
        %v747 = vld [vmem:[#allocation2 + $0x20] sm:$0xff]
        %v748 = vld [vmem:[#allocation2 + $0x28] sm:$0xff]
        %v749 = vld [vmem:[#allocation2 + $0x30] sm:$0xff]
        %v750 = vld [vmem:[#allocation2 + $0x38] sm:$0xff]
        %v751 = vld [vmem:[#allocation2 + $0x40] sm:$0xff]
        %v752 = vld [vmem:[#allocation2 + $0x48] sm:$0xff]
        %v753 = vld [vmem:[#allocation2 + $0x50] sm:$0xff]
        %v754 = vld [vmem:[#allocation2 + $0x58] sm:$0xff]
        %v755 = vld [vmem:[#allocation2 + $0x60] sm:$0xff]
        %v756 = vld [vmem:[#allocation2 + $0x68] sm:$0xff]
        %v757 = vld [vmem:[#allocation2 + $0x70] sm:$0xff]
        %v758 = vld [vmem:[#allocation2 + $0x78] sm:$0xff]
        %v759 = vld [vmem:[#allocation2 + $0x80] sm:$0xff]
        %v760 = vld [vmem:[#allocation2 + $0x88] sm:$0xff]
        %v761 = vld [vmem:[#allocation2 + $0x90] sm:$0xff]
        %v762 = vld [vmem:[#allocation2 + $0x98] sm:$0xff]
        %v763 = vld [vmem:[#allocation2 + $0xa0] sm:$0xff]
        %v764 = vld [vmem:[#allocation2 + $0xa8] sm:$0xff]
        %v765 = vld [vmem:[#allocation2 + $0xb0] sm:$0xff]
        %v766 = vld [vmem:[#allocation2 + $0xb8] sm:$0xff]
        %v767 = vld [vmem:[#allocation2 + $0xc0] sm:$0xff]
        %v768 = vld [vmem:[#allocation2 + $0xc8] sm:$0xff]
        %v769 = vld [vmem:[#allocation2 + $0xd0] sm:$0xff]
        %v770 = vld [vmem:[#allocation2 + $0xd8] sm:$0xff]
        %v771 = vld [vmem:[#allocation2 + $0xe0] sm:$0xff]
        %v772 = vld [vmem:[#allocation2 + $0xe8] sm:$0xff]
        %v773 = vld [vmem:[#allocation2 + $0xf0] sm:$0xff]
        %v774 = vld [vmem:[#allocation2 + $0xf8] sm:$0xff]
        %v775 = vld [vmem:[#allocation2 + $0x100] sm:$0xff]
        %v776 = vld [vmem:[#allocation2 + $0x108] sm:$0xff]
        %v777 = vld [vmem:[#allocation2 + $0x110] sm:$0xff]
        %v778 = vld [vmem:[#allocation2 + $0x118] sm:$0xff]
        %v779 = vld [vmem:[#allocation2 + $0x120] sm:$0xff]
        %v780 = vld [vmem:[#allocation2 + $0x128] sm:$0xff]
        %v781 = vld [vmem:[#allocation2 + $0x130] sm:$0xff]
        %v782 = vld [vmem:[#allocation2 + $0x138] sm:$0xff]
        %v783 = vld [vmem:[#allocation2 + $0x140] sm:$0xff]
        %v784 = vld [vmem:[#allocation2 + $0x148] sm:$0xff]
        %v785 = vld [vmem:[#allocation2 + $0x150] sm:$0xff]
        %v786 = vld [vmem:[#allocation2 + $0x158] sm:$0xff]
        %v787 = vld [vmem:[#allocation2 + $0x160] sm:$0xff]
        %v788 = vld [vmem:[#allocation2 + $0x168] sm:$0xff]
        %v789 = vld [vmem:[#allocation2 + $0x170] sm:$0xff]
        %v790 = vld [vmem:[#allocation2 + $0x178] sm:$0xff]
        %v791 = vld [vmem:[#allocation2 + $0x180] sm:$0xff]
        %v792 = vld [vmem:[#allocation2 + $0x188] sm:$0xff]
        %v793 = vld [vmem:[#allocation2 + $0x190] sm:$0xff]
        %v794 = vld [vmem:[#allocation2 + $0x198] sm:$0xff]
        %v795 = vld [vmem:[#allocation2 + $0x1a0] sm:$0xff]
        %v796 = vld [vmem:[#allocation2 + $0x1a8] sm:$0xff]
        %v797 = vld [vmem:[#allocation2 + $0x1b0] sm:$0xff]
        %v798 = vld [vmem:[#allocation2 + $0x1b8] sm:$0xff]
        %v799 = vld [vmem:[#allocation2 + $0x1c0] sm:$0xff]
        %v800 = vld [vmem:[#allocation2 + $0x1c8] sm:$0xff]
        %v801 = vld [vmem:[#allocation2 + $0x1d0] sm:$0xff]
        %v802 = vld [vmem:[#allocation2 + $0x1d8] sm:$0xff]
        %v803 = vld [vmem:[#allocation2 + $0x1e0] sm:$0xff]
        %v804 = vld [vmem:[#allocation2 + $0x1e8] sm:$0xff]
        %v805 = vld [vmem:[#allocation2 + $0x1f0] sm:$0xff]
        %v806 = vld [vmem:[#allocation2 + $0x1f8] sm:$0xff]
        %807 = vmatpush.msra.mxu0 %v773
        %808 = vmatpush.msra.mxu0 %v771
        %809 = vmatpush.msra.mxu0 %v769
        %810 = vmatpush.msra.mxu0 %v767
        %811 = vmatpush.msra.mxu0 %v765
        %812 = vmatpush.msra.mxu0 %v763
        %813 = vmatpush.msra.mxu0 %v761
        %814 = vmatpush.msra.mxu0 %v759
        %815 = vmatpush.msra.mxu0 %v757
        %816 = vmatpush.msra.mxu0 %v755
        %817 = vmatpush.msra.mxu0 %v753
        %818 = vmatpush.msra.mxu0 %v751
        %819 = vmatpush.msra.mxu0 %v749
        %820 = vmatpush.msra.mxu0 %v747
        %821 = vmatpush.msra.mxu0 %v745
        %822 = vmatpush.msra.mxu0 %v743
        %823 = vmatmul.f32.gmra.mxu0 %v727
        %v824 = vpop.f32.mrf.mxu0
        %v825 = vadd.f32 0.0, %v824
        %826 = vmatmul.f32.gmra.mxu0 %v729
        %v827 = vpop.f32.mrf.mxu0
        %v828 = vadd.f32 0.0, %v827
        %829 = vmatmul.f32.gmra.mxu0 %v731
        %v830 = vpop.f32.mrf.mxu0
        %v831 = vadd.f32 0.0, %v830
        %832 = vmatmul.f32.gmra.mxu0 %v733
        %v833 = vpop.f32.mrf.mxu0
        %v834 = vadd.f32 0.0, %v833
        %835 = vmatmul.f32.gmra.mxu0 %v735
        %v836 = vpop.f32.mrf.mxu0
        %v837 = vadd.f32 0.0, %v836
        %838 = vmatmul.f32.gmra.mxu0 %v737
        %v839 = vpop.f32.mrf.mxu0
        %v840 = vadd.f32 0.0, %v839
        %841 = vmatmul.f32.gmra.mxu0 %v739
        %v842 = vpop.f32.mrf.mxu0
        %v843 = vadd.f32 0.0, %v842
        %844 = vmatmul.f32.gmra.mxu0 %v741
        %v845 = vpop.f32.mrf.mxu0
        %v846 = vadd.f32 0.0, %v845
        %847 = vdwg.mxu0
        %848 = vmatpush.msra.mxu0 %v805
        %849 = vmatpush.msra.mxu0 %v803
        %850 = vmatpush.msra.mxu0 %v801
        %851 = vmatpush.msra.mxu0 %v799
        %852 = vmatpush.msra.mxu0 %v797
        %853 = vmatpush.msra.mxu0 %v795
        %854 = vmatpush.msra.mxu0 %v793
        %855 = vmatpush.msra.mxu0 %v791
        %856 = vmatpush.msra.mxu0 %v789
        %857 = vmatpush.msra.mxu0 %v787
        %858 = vmatpush.msra.mxu0 %v785
        %859 = vmatpush.msra.mxu0 %v783
        %860 = vmatpush.msra.mxu0 %v781
        %861 = vmatpush.msra.mxu0 %v779
        %862 = vmatpush.msra.mxu0 %v777
        %863 = vmatpush.msra.mxu0 %v775
        %864 = vmatmul.f32.gmra.mxu0 %v728
        %v865 = vpop.f32.mrf.mxu0
        %v866 = vadd.f32 %v825, %v865
        %867 = vmatmul.f32.gmra.mxu0 %v730
        %v868 = vpop.f32.mrf.mxu0
        %v869 = vadd.f32 %v828, %v868
        %870 = vmatmul.f32.gmra.mxu0 %v732
        %v871 = vpop.f32.mrf.mxu0
        %v872 = vadd.f32 %v831, %v871
        %873 = vmatmul.f32.gmra.mxu0 %v734
        %v874 = vpop.f32.mrf.mxu0
        %v875 = vadd.f32 %v834, %v874
        %876 = vmatmul.f32.gmra.mxu0 %v736
        %v877 = vpop.f32.mrf.mxu0
        %v878 = vadd.f32 %v837, %v877
        %879 = vmatmul.f32.gmra.mxu0 %v738
        %v880 = vpop.f32.mrf.mxu0
        %v881 = vadd.f32 %v840, %v880
        %882 = vmatmul.f32.gmra.mxu0 %v740
        %v883 = vpop.f32.mrf.mxu0
        %v884 = vadd.f32 %v843, %v883
        %885 = vmatmul.f32.gmra.mxu0 %v742
        %v886 = vpop.f32.mrf.mxu0
        %v887 = vadd.f32 %v846, %v886
        %888 = vdwg.mxu0
        %889 = vmatpush.msra.mxu0 %v774
        %890 = vmatpush.msra.mxu0 %v772
        %891 = vmatpush.msra.mxu0 %v770
        %892 = vmatpush.msra.mxu0 %v768
        %893 = vmatpush.msra.mxu0 %v766
        %894 = vmatpush.msra.mxu0 %v764
        %895 = vmatpush.msra.mxu0 %v762
        %896 = vmatpush.msra.mxu0 %v760
        %897 = vmatpush.msra.mxu0 %v758
        %898 = vmatpush.msra.mxu0 %v756
        %899 = vmatpush.msra.mxu0 %v754
        %900 = vmatpush.msra.mxu0 %v752
        %901 = vmatpush.msra.mxu0 %v750
        %902 = vmatpush.msra.mxu0 %v748
        %903 = vmatpush.msra.mxu0 %v746
        %904 = vmatpush.msra.mxu0 %v744
        %905 = vmatmul.f32.gmra.mxu0 %v727
        %v906 = vpop.f32.mrf.mxu0
        %v907 = vadd.f32 0.0, %v906
        %908 = vmatmul.f32.gmra.mxu0 %v729
        %v909 = vpop.f32.mrf.mxu0
        %v910 = vadd.f32 0.0, %v909
        %911 = vmatmul.f32.gmra.mxu0 %v731
        %v912 = vpop.f32.mrf.mxu0
        %v913 = vadd.f32 0.0, %v912
        %914 = vmatmul.f32.gmra.mxu0 %v733
        %v915 = vpop.f32.mrf.mxu0
        %v916 = vadd.f32 0.0, %v915
        %917 = vmatmul.f32.gmra.mxu0 %v735
        %v918 = vpop.f32.mrf.mxu0
        %v919 = vadd.f32 0.0, %v918
        %920 = vmatmul.f32.gmra.mxu0 %v737
        %v921 = vpop.f32.mrf.mxu0
        %v922 = vadd.f32 0.0, %v921
        %923 = vmatmul.f32.gmra.mxu0 %v739
        %v924 = vpop.f32.mrf.mxu0
        %v925 = vadd.f32 0.0, %v924
        %926 = vmatmul.f32.gmra.mxu0 %v741
        %v927 = vpop.f32.mrf.mxu0
        %v928 = vadd.f32 0.0, %v927
        %929 = vdwg.mxu0
        %930 = vmatpush.msra.mxu0 %v806
        %931 = vmatpush.msra.mxu0 %v804
        %932 = vmatpush.msra.mxu0 %v802
        %933 = vmatpush.msra.mxu0 %v800
        %934 = vmatpush.msra.mxu0 %v798
        %935 = vmatpush.msra.mxu0 %v796
        %936 = vmatpush.msra.mxu0 %v794
        %937 = vmatpush.msra.mxu0 %v792
        %938 = vmatpush.msra.mxu0 %v790
        %939 = vmatpush.msra.mxu0 %v788
        %940 = vmatpush.msra.mxu0 %v786
        %941 = vmatpush.msra.mxu0 %v784
        %942 = vmatpush.msra.mxu0 %v782
        %943 = vmatpush.msra.mxu0 %v780
        %944 = vmatpush.msra.mxu0 %v778
        %945 = vmatpush.msra.mxu0 %v776
        %946 = vmatmul.f32.gmra.mxu0 %v728
        %v947 = vpop.f32.mrf.mxu0
        %v948 = vadd.f32 %v907, %v947
        %949 = vmatmul.f32.gmra.mxu0 %v730
        %v950 = vpop.f32.mrf.mxu0
        %v951 = vadd.f32 %v910, %v950
        %952 = vmatmul.f32.gmra.mxu0 %v732
        %v953 = vpop.f32.mrf.mxu0
        %v954 = vadd.f32 %v913, %v953
        %955 = vmatmul.f32.gmra.mxu0 %v734
        %v956 = vpop.f32.mrf.mxu0
        %v957 = vadd.f32 %v916, %v956
        %958 = vmatmul.f32.gmra.mxu0 %v736
        %v959 = vpop.f32.mrf.mxu0
        %v960 = vadd.f32 %v919, %v959
        %961 = vmatmul.f32.gmra.mxu0 %v738
        %v962 = vpop.f32.mrf.mxu0
        %v963 = vadd.f32 %v922, %v962
        %964 = vmatmul.f32.gmra.mxu0 %v740
        %v965 = vpop.f32.mrf.mxu0
        %v966 = vadd.f32 %v925, %v965
        %967 = vmatmul.f32.gmra.mxu0 %v742
        %v968 = vpop.f32.mrf.mxu0
        %v969 = vadd.f32 %v928, %v968
        %970 = vdwg.mxu0
        %v971 = vld [vmem:[#allocation5] sm:$0xff]
        %v972 = vld [vmem:[#allocation5 + $0x8] sm:$0xff]
        %v973 = vld [vmem:[#allocation5 + $0x10] sm:$0xff]
        %v974 = vld [vmem:[#allocation5 + $0x18] sm:$0xff]
        %v975 = vld [vmem:[#allocation5 + $0x20] sm:$0xff]
        %v976 = vld [vmem:[#allocation5 + $0x28] sm:$0xff]
        %v977 = vld [vmem:[#allocation5 + $0x30] sm:$0xff]
        %v978 = vld [vmem:[#allocation5 + $0x38] sm:$0xff]
        %v979 = vld [vmem:[#allocation5 + $0x40] sm:$0xff]
        %v980 = vld [vmem:[#allocation5 + $0x48] sm:$0xff]
        %v981 = vld [vmem:[#allocation5 + $0x50] sm:$0xff]
        %v982 = vld [vmem:[#allocation5 + $0x58] sm:$0xff]
        %v983 = vld [vmem:[#allocation5 + $0x60] sm:$0xff]
        %v984 = vld [vmem:[#allocation5 + $0x68] sm:$0xff]
        %v985 = vld [vmem:[#allocation5 + $0x70] sm:$0xff]
        %v986 = vld [vmem:[#allocation5 + $0x78] sm:$0xff]
        %v987 = vld [vmem:[#allocation5 + $0x80] sm:$0xff]
        %v988 = vld [vmem:[#allocation5 + $0x88] sm:$0xff]
        %v989 = vld [vmem:[#allocation5 + $0x90] sm:$0xff]
        %v990 = vld [vmem:[#allocation5 + $0x98] sm:$0xff]
        %v991 = vld [vmem:[#allocation5 + $0xa0] sm:$0xff]
        %v992 = vld [vmem:[#allocation5 + $0xa8] sm:$0xff]
        %v993 = vld [vmem:[#allocation5 + $0xb0] sm:$0xff]
        %v994 = vld [vmem:[#allocation5 + $0xb8] sm:$0xff]
        %v995 = vld [vmem:[#allocation5 + $0xc0] sm:$0xff]
        %v996 = vld [vmem:[#allocation5 + $0xc8] sm:$0xff]
        %v997 = vld [vmem:[#allocation5 + $0xd0] sm:$0xff]
        %v998 = vld [vmem:[#allocation5 + $0xd8] sm:$0xff]
        %v999 = vld [vmem:[#allocation5 + $0xe0] sm:$0xff]
        %v1000 = vld [vmem:[#allocation5 + $0xe8] sm:$0xff]
        %v1001 = vld [vmem:[#allocation5 + $0xf0] sm:$0xff]
        %v1002 = vld [vmem:[#allocation5 + $0xf8] sm:$0xff]
        %v1003 = vld [vmem:[#allocation5 + $0x100] sm:$0xff]
        %v1004 = vld [vmem:[#allocation5 + $0x108] sm:$0xff]
        %v1005 = vld [vmem:[#allocation5 + $0x110] sm:$0xff]
        %v1006 = vld [vmem:[#allocation5 + $0x118] sm:$0xff]
        %v1007 = vld [vmem:[#allocation5 + $0x120] sm:$0xff]
        %v1008 = vld [vmem:[#allocation5 + $0x128] sm:$0xff]
        %v1009 = vld [vmem:[#allocation5 + $0x130] sm:$0xff]
        %v1010 = vld [vmem:[#allocation5 + $0x138] sm:$0xff]
        %v1011 = vld [vmem:[#allocation5 + $0x140] sm:$0xff]
        %v1012 = vld [vmem:[#allocation5 + $0x148] sm:$0xff]
        %v1013 = vld [vmem:[#allocation5 + $0x150] sm:$0xff]
        %v1014 = vld [vmem:[#allocation5 + $0x158] sm:$0xff]
        %v1015 = vld [vmem:[#allocation5 + $0x160] sm:$0xff]
        %v1016 = vld [vmem:[#allocation5 + $0x168] sm:$0xff]
        %v1017 = vld [vmem:[#allocation5 + $0x170] sm:$0xff]
        %v1018 = vld [vmem:[#allocation5 + $0x178] sm:$0xff]
        %v1019 = vld [vmem:[#allocation5 + $0x180] sm:$0xff]
        %v1020 = vld [vmem:[#allocation5 + $0x188] sm:$0xff]
        %v1021 = vld [vmem:[#allocation5 + $0x190] sm:$0xff]
        %v1022 = vld [vmem:[#allocation5 + $0x198] sm:$0xff]
        %v1023 = vld [vmem:[#allocation5 + $0x1a0] sm:$0xff]
        %v1024 = vld [vmem:[#allocation5 + $0x1a8] sm:$0xff]
        %v1025 = vld [vmem:[#allocation5 + $0x1b0] sm:$0xff]
        %v1026 = vld [vmem:[#allocation5 + $0x1b8] sm:$0xff]
        %v1027 = vld [vmem:[#allocation5 + $0x1c0] sm:$0xff]
        %v1028 = vld [vmem:[#allocation5 + $0x1c8] sm:$0xff]
        %v1029 = vld [vmem:[#allocation5 + $0x1d0] sm:$0xff]
        %v1030 = vld [vmem:[#allocation5 + $0x1d8] sm:$0xff]
        %v1031 = vld [vmem:[#allocation5 + $0x1e0] sm:$0xff]
        %v1032 = vld [vmem:[#allocation5 + $0x1e8] sm:$0xff]
        %v1033 = vld [vmem:[#allocation5 + $0x1f0] sm:$0xff]
        %v1034 = vld [vmem:[#allocation5 + $0x1f8] sm:$0xff]
        %1035 = vmatpush.msra.mxu0 %v1001
        %1036 = vmatpush.msra.mxu0 %v999
        %1037 = vmatpush.msra.mxu0 %v997
        %1038 = vmatpush.msra.mxu0 %v995
        %1039 = vmatpush.msra.mxu0 %v993
        %1040 = vmatpush.msra.mxu0 %v991
        %1041 = vmatpush.msra.mxu0 %v989
        %1042 = vmatpush.msra.mxu0 %v987
        %1043 = vmatpush.msra.mxu0 %v985
        %1044 = vmatpush.msra.mxu0 %v983
        %1045 = vmatpush.msra.mxu0 %v981
        %1046 = vmatpush.msra.mxu0 %v979
        %1047 = vmatpush.msra.mxu0 %v977
        %1048 = vmatpush.msra.mxu0 %v975
        %1049 = vmatpush.msra.mxu0 %v973
        %1050 = vmatpush.msra.mxu0 %v971
        %1051 = vmatmul.f32.gmra.mxu0 %v727
        %v1052 = vpop.f32.mrf.mxu0
        %v1053 = vadd.f32 0.0, %v1052
        %1054 = vmatmul.f32.gmra.mxu0 %v729
        %v1055 = vpop.f32.mrf.mxu0
        %v1056 = vadd.f32 0.0, %v1055
        %1057 = vmatmul.f32.gmra.mxu0 %v731
        %v1058 = vpop.f32.mrf.mxu0
        %v1059 = vadd.f32 0.0, %v1058
        %1060 = vmatmul.f32.gmra.mxu0 %v733
        %v1061 = vpop.f32.mrf.mxu0
        %v1062 = vadd.f32 0.0, %v1061
        %1063 = vmatmul.f32.gmra.mxu0 %v735
        %v1064 = vpop.f32.mrf.mxu0
        %v1065 = vadd.f32 0.0, %v1064
        %1066 = vmatmul.f32.gmra.mxu0 %v737
        %v1067 = vpop.f32.mrf.mxu0
        %v1068 = vadd.f32 0.0, %v1067
        %1069 = vmatmul.f32.gmra.mxu0 %v739
        %v1070 = vpop.f32.mrf.mxu0
        %v1071 = vadd.f32 0.0, %v1070
        %1072 = vmatmul.f32.gmra.mxu0 %v741
        %v1073 = vpop.f32.mrf.mxu0
        %v1074 = vadd.f32 0.0, %v1073
        %1075 = vdwg.mxu0
        %1076 = vmatpush.msra.mxu0 %v1033
        %1077 = vmatpush.msra.mxu0 %v1031
        %1078 = vmatpush.msra.mxu0 %v1029
        %1079 = vmatpush.msra.mxu0 %v1027
        %1080 = vmatpush.msra.mxu0 %v1025
        %1081 = vmatpush.msra.mxu0 %v1023
        %1082 = vmatpush.msra.mxu0 %v1021
        %1083 = vmatpush.msra.mxu0 %v1019
        %1084 = vmatpush.msra.mxu0 %v1017
        %1085 = vmatpush.msra.mxu0 %v1015
        %1086 = vmatpush.msra.mxu0 %v1013
        %1087 = vmatpush.msra.mxu0 %v1011
        %1088 = vmatpush.msra.mxu0 %v1009
        %1089 = vmatpush.msra.mxu0 %v1007
        %1090 = vmatpush.msra.mxu0 %v1005
        %1091 = vmatpush.msra.mxu0 %v1003
        %1092 = vmatmul.f32.gmra.mxu0 %v728
        %v1093 = vpop.f32.mrf.mxu0
        %v1094 = vadd.f32 %v1053, %v1093
        %1095 = vmatmul.f32.gmra.mxu0 %v730
        %v1096 = vpop.f32.mrf.mxu0
        %v1097 = vadd.f32 %v1056, %v1096
        %1098 = vmatmul.f32.gmra.mxu0 %v732
        %v1099 = vpop.f32.mrf.mxu0
        %v1100 = vadd.f32 %v1059, %v1099
        %1101 = vmatmul.f32.gmra.mxu0 %v734
        %v1102 = vpop.f32.mrf.mxu0
        %v1103 = vadd.f32 %v1062, %v1102
        %1104 = vmatmul.f32.gmra.mxu0 %v736
        %v1105 = vpop.f32.mrf.mxu0
        %v1106 = vadd.f32 %v1065, %v1105
        %1107 = vmatmul.f32.gmra.mxu0 %v738
        %v1108 = vpop.f32.mrf.mxu0
        %v1109 = vadd.f32 %v1068, %v1108
        %1110 = vmatmul.f32.gmra.mxu0 %v740
        %v1111 = vpop.f32.mrf.mxu0
        %v1112 = vadd.f32 %v1071, %v1111
        %1113 = vmatmul.f32.gmra.mxu0 %v742
        %v1114 = vpop.f32.mrf.mxu0
        %v1115 = vadd.f32 %v1074, %v1114
        %1116 = vdwg.mxu0
        %1117 = vmatpush.msra.mxu0 %v1002
        %1118 = vmatpush.msra.mxu0 %v1000
        %1119 = vmatpush.msra.mxu0 %v998
        %1120 = vmatpush.msra.mxu0 %v996
        %1121 = vmatpush.msra.mxu0 %v994
        %1122 = vmatpush.msra.mxu0 %v992
        %1123 = vmatpush.msra.mxu0 %v990
        %1124 = vmatpush.msra.mxu0 %v988
        %1125 = vmatpush.msra.mxu0 %v986
        %1126 = vmatpush.msra.mxu0 %v984
        %1127 = vmatpush.msra.mxu0 %v982
        %1128 = vmatpush.msra.mxu0 %v980
        %1129 = vmatpush.msra.mxu0 %v978
        %1130 = vmatpush.msra.mxu0 %v976
        %1131 = vmatpush.msra.mxu0 %v974
        %1132 = vmatpush.msra.mxu0 %v972
        %1133 = vmatmul.f32.gmra.mxu0 %v727
        %v1134 = vpop.f32.mrf.mxu0
        %v1135 = vadd.f32 0.0, %v1134
        %1136 = vmatmul.f32.gmra.mxu0 %v729
        %v1137 = vpop.f32.mrf.mxu0
        %v1138 = vadd.f32 0.0, %v1137
        %1139 = vmatmul.f32.gmra.mxu0 %v731
        %v1140 = vpop.f32.mrf.mxu0
        %v1141 = vadd.f32 0.0, %v1140
        %1142 = vmatmul.f32.gmra.mxu0 %v733
        %v1143 = vpop.f32.mrf.mxu0
        %v1144 = vadd.f32 0.0, %v1143
        %1145 = vmatmul.f32.gmra.mxu0 %v735
        %v1146 = vpop.f32.mrf.mxu0
        %v1147 = vadd.f32 0.0, %v1146
        %1148 = vmatmul.f32.gmra.mxu0 %v737
        %v1149 = vpop.f32.mrf.mxu0
        %v1150 = vadd.f32 0.0, %v1149
        %1151 = vmatmul.f32.gmra.mxu0 %v739
        %v1152 = vpop.f32.mrf.mxu0
        %v1153 = vadd.f32 0.0, %v1152
        %1154 = vmatmul.f32.gmra.mxu0 %v741
        %v1155 = vpop.f32.mrf.mxu0
        %v1156 = vadd.f32 0.0, %v1155
        %1157 = vdwg.mxu0
        %1158 = vmatpush.msra.mxu0 %v1034
        %1159 = vmatpush.msra.mxu0 %v1032
        %1160 = vmatpush.msra.mxu0 %v1030
        %1161 = vmatpush.msra.mxu0 %v1028
        %1162 = vmatpush.msra.mxu0 %v1026
        %1163 = vmatpush.msra.mxu0 %v1024
        %1164 = vmatpush.msra.mxu0 %v1022
        %1165 = vmatpush.msra.mxu0 %v1020
        %1166 = vmatpush.msra.mxu0 %v1018
        %1167 = vmatpush.msra.mxu0 %v1016
        %1168 = vmatpush.msra.mxu0 %v1014
        %1169 = vmatpush.msra.mxu0 %v1012
        %1170 = vmatpush.msra.mxu0 %v1010
        %1171 = vmatpush.msra.mxu0 %v1008
        %1172 = vmatpush.msra.mxu0 %v1006
        %1173 = vmatpush.msra.mxu0 %v1004
        %1174 = vmatmul.f32.gmra.mxu0 %v728
        %v1175 = vpop.f32.mrf.mxu0
        %v1176 = vadd.f32 %v1135, %v1175
        %1177 = vmatmul.f32.gmra.mxu0 %v730
        %v1178 = vpop.f32.mrf.mxu0
        %v1179 = vadd.f32 %v1138, %v1178
        %1180 = vmatmul.f32.gmra.mxu0 %v732
        %v1181 = vpop.f32.mrf.mxu0
        %v1182 = vadd.f32 %v1141, %v1181
        %1183 = vmatmul.f32.gmra.mxu0 %v734
        %v1184 = vpop.f32.mrf.mxu0
        %v1185 = vadd.f32 %v1144, %v1184
        %1186 = vmatmul.f32.gmra.mxu0 %v736
        %v1187 = vpop.f32.mrf.mxu0
        %v1188 = vadd.f32 %v1147, %v1187
        %1189 = vmatmul.f32.gmra.mxu0 %v738
        %v1190 = vpop.f32.mrf.mxu0
        %v1191 = vadd.f32 %v1150, %v1190
        %1192 = vmatmul.f32.gmra.mxu0 %v740
        %v1193 = vpop.f32.mrf.mxu0
        %v1194 = vadd.f32 %v1153, %v1193
        %1195 = vmatmul.f32.gmra.mxu0 %v742
        %v1196 = vpop.f32.mrf.mxu0
        %v1197 = vadd.f32 %v1156, %v1196
        %1198 = vdwg.mxu0
        %v1199 = vld [vmem:[%s1] sm:$0xff]
        %v1200 = vld [vmem:[%s1 + $0x8] sm:$0xff]
        %v1201 = vld [vmem:[%s1 + $0x10] sm:$0xff]
        %v1202 = vld [vmem:[%s1 + $0x18] sm:$0xff]
        %v1203 = vld [vmem:[%s1 + $0x20] sm:$0xff]
        %v1204 = vld [vmem:[%s1 + $0x28] sm:$0xff]
        %v1205 = vld [vmem:[%s1 + $0x30] sm:$0xff]
        %v1206 = vld [vmem:[%s1 + $0x38] sm:$0xff]
        %v1207 = vld [vmem:[%s1 + $0x40] sm:$0xff]
        %v1208 = vld [vmem:[%s1 + $0x48] sm:$0xff]
        %v1209 = vld [vmem:[%s1 + $0x50] sm:$0xff]
        %v1210 = vld [vmem:[%s1 + $0x58] sm:$0xff]
        %v1211 = vld [vmem:[%s1 + $0x60] sm:$0xff]
        %v1212 = vld [vmem:[%s1 + $0x68] sm:$0xff]
        %v1213 = vld [vmem:[%s1 + $0x70] sm:$0xff]
        %v1214 = vld [vmem:[%s1 + $0x78] sm:$0xff]
        %v1215 = vld [vmem:[%s1 + $0x80] sm:$0xff]
        %v1216 = vld [vmem:[%s1 + $0x88] sm:$0xff]
        %v1217 = vld [vmem:[%s1 + $0x90] sm:$0xff]
        %v1218 = vld [vmem:[%s1 + $0x98] sm:$0xff]
        %v1219 = vld [vmem:[%s1 + $0xa0] sm:$0xff]
        %v1220 = vld [vmem:[%s1 + $0xa8] sm:$0xff]
        %v1221 = vld [vmem:[%s1 + $0xb0] sm:$0xff]
        %v1222 = vld [vmem:[%s1 + $0xb8] sm:$0xff]
        %v1223 = vld [vmem:[%s1 + $0xc0] sm:$0xff]
        %v1224 = vld [vmem:[%s1 + $0xc8] sm:$0xff]
        %v1225 = vld [vmem:[%s1 + $0xd0] sm:$0xff]
        %v1226 = vld [vmem:[%s1 + $0xd8] sm:$0xff]
        %v1227 = vld [vmem:[%s1 + $0xe0] sm:$0xff]
        %v1228 = vld [vmem:[%s1 + $0xe8] sm:$0xff]
        %v1229 = vld [vmem:[%s1 + $0xf0] sm:$0xff]
        %v1230 = vld [vmem:[%s1 + $0xf8] sm:$0xff]
        %1231 = vmatpush.msra.mxu0 %v1214
        %1232 = vmatpush.msra.mxu0 %v1213
        %1233 = vmatpush.msra.mxu0 %v1212
        %1234 = vmatpush.msra.mxu0 %v1211
        %1235 = vmatpush.msra.mxu0 %v1210
        %1236 = vmatpush.msra.mxu0 %v1209
        %1237 = vmatpush.msra.mxu0 %v1208
        %1238 = vmatpush.msra.mxu0 %v1207
        %1239 = vmatpush.msra.mxu0 %v1206
        %1240 = vmatpush.msra.mxu0 %v1205
        %1241 = vmatpush.msra.mxu0 %v1204
        %1242 = vmatpush.msra.mxu0 %v1203
        %1243 = vmatpush.msra.mxu0 %v1202
        %1244 = vmatpush.msra.mxu0 %v1201
        %1245 = vmatpush.msra.mxu0 %v1200
        %1246 = vmatpush.msra.mxu0 %v1199
        %1247 = vmatmul.f32.gmra.mxu0 %v866
        %v1248 = vpop.f32.mrf.mxu0
        %v1249 = vadd.f32 0.0, %v1248
        %1250 = vmatmul.f32.gmra.mxu0 %v869
        %v1251 = vpop.f32.mrf.mxu0
        %v1252 = vadd.f32 0.0, %v1251
        %1253 = vmatmul.f32.gmra.mxu0 %v872
        %v1254 = vpop.f32.mrf.mxu0
        %v1255 = vadd.f32 0.0, %v1254
        %1256 = vmatmul.f32.gmra.mxu0 %v875
        %v1257 = vpop.f32.mrf.mxu0
        %v1258 = vadd.f32 0.0, %v1257
        %1259 = vmatmul.f32.gmra.mxu0 %v878
        %v1260 = vpop.f32.mrf.mxu0
        %v1261 = vadd.f32 0.0, %v1260
        %1262 = vmatmul.f32.gmra.mxu0 %v881
        %v1263 = vpop.f32.mrf.mxu0
        %v1264 = vadd.f32 0.0, %v1263
        %1265 = vmatmul.f32.gmra.mxu0 %v884
        %v1266 = vpop.f32.mrf.mxu0
        %v1267 = vadd.f32 0.0, %v1266
        %1268 = vmatmul.f32.gmra.mxu0 %v887
        %v1269 = vpop.f32.mrf.mxu0
        %v1270 = vadd.f32 0.0, %v1269
        %1271 = vdwg.mxu0
        %1272 = vmatpush.msra.mxu0 %v1230
        %1273 = vmatpush.msra.mxu0 %v1229
        %1274 = vmatpush.msra.mxu0 %v1228
        %1275 = vmatpush.msra.mxu0 %v1227
        %1276 = vmatpush.msra.mxu0 %v1226
        %1277 = vmatpush.msra.mxu0 %v1225
        %1278 = vmatpush.msra.mxu0 %v1224
        %1279 = vmatpush.msra.mxu0 %v1223
        %1280 = vmatpush.msra.mxu0 %v1222
        %1281 = vmatpush.msra.mxu0 %v1221
        %1282 = vmatpush.msra.mxu0 %v1220
        %1283 = vmatpush.msra.mxu0 %v1219
        %1284 = vmatpush.msra.mxu0 %v1218
        %1285 = vmatpush.msra.mxu0 %v1217
        %1286 = vmatpush.msra.mxu0 %v1216
        %1287 = vmatpush.msra.mxu0 %v1215
        %1288 = vmatmul.f32.gmra.mxu0 %v948
        %v1289 = vpop.f32.mrf.mxu0
        %v1290 = vadd.f32 %v1249, %v1289
        %1291 = vmatmul.f32.gmra.mxu0 %v951
        %v1292 = vpop.f32.mrf.mxu0
        %v1293 = vadd.f32 %v1252, %v1292
        %1294 = vmatmul.f32.gmra.mxu0 %v954
        %v1295 = vpop.f32.mrf.mxu0
        %v1296 = vadd.f32 %v1255, %v1295
        %1297 = vmatmul.f32.gmra.mxu0 %v957
        %v1298 = vpop.f32.mrf.mxu0
        %v1299 = vadd.f32 %v1258, %v1298
        %1300 = vmatmul.f32.gmra.mxu0 %v960
        %v1301 = vpop.f32.mrf.mxu0
        %v1302 = vadd.f32 %v1261, %v1301
        %1303 = vmatmul.f32.gmra.mxu0 %v963
        %v1304 = vpop.f32.mrf.mxu0
        %v1305 = vadd.f32 %v1264, %v1304
        %1306 = vmatmul.f32.gmra.mxu0 %v966
        %v1307 = vpop.f32.mrf.mxu0
        %v1308 = vadd.f32 %v1267, %v1307
        %1309 = vmatmul.f32.gmra.mxu0 %v969
        %v1310 = vpop.f32.mrf.mxu0
        %v1311 = vadd.f32 %v1270, %v1310
        %1312 = vdwg.mxu0
        %vm1313 = vcmask 7168
        %v1314 = vsel %vm1313, %v1290, -inf
        %v1315 = vsel %vm1313, %v1293, -inf
        %v1316 = vsel %vm1313, %v1296, -inf
        %v1317 = vsel %vm1313, %v1299, -inf
        %v1318 = vsel %vm1313, %v1302, -inf
        %v1319 = vmax.f32 %v1314, %v1318
        %v1320 = vsel %vm1313, %v1305, -inf
        %v1321 = vmax.f32 %v1315, %v1320
        %v1322 = vsel %vm1313, %v1308, -inf
        %v1323 = vmax.f32 %v1316, %v1322
        %v1324 = vsel %vm1313, %v1311, -inf
        %v1325 = vmax.f32 %v1317, %v1324
        %v1326 = vmax.f32 %v1319, %v1321
        %v1327 = vmax.f32 %v1323, %v1325
        %v1328 = vmax.f32 %v1326, %v1327
        %v1329 = vrot.slane %v1328, 4
        %v1330 = vmax.f32 %v1328, %v1329
        %v1331 = vrot.slane %v1330, 2
        %v1332 = vmax.f32 %v1330, %v1331
        %v1333 = vrot.slane %v1332, 1
        %v1334 = vmax.f32 %v1332, %v1333
        %v1335 = vsub.f32 %v1290, %v1334
        %v1336 = vsub.f32 %v1293, %v1334
        %v1337 = vsub.f32 %v1296, %v1334
        %v1338 = vsub.f32 %v1299, %v1334
        %v1339 = vsub.f32 %v1302, %v1334
        %v1340 = vsub.f32 %v1305, %v1334
        %v1341 = vsub.f32 %v1308, %v1334
        %v1342 = vsub.f32 %v1311, %v1334
        %v1343 = vmul.f32 %v1335, 1.442695
        %v1344 = vpow.pop %v1343
        %v1345 = vmul.f32 %v1336, 1.442695
        %v1346 = vpow.pop %v1345
        %v1347 = vmul.f32 %v1337, 1.442695
        %v1348 = vpow.pop %v1347
        %v1349 = vmul.f32 %v1338, 1.442695
        %v1350 = vpow.pop %v1349
        %v1351 = vmul.f32 %v1339, 1.442695
        %v1352 = vpow.pop %v1351
        %v1353 = vmul.f32 %v1340, 1.442695
        %v1354 = vpow.pop %v1353
        %v1355 = vmul.f32 %v1341, 1.442695
        %v1356 = vpow.pop %v1355
        %v1357 = vmul.f32 %v1342, 1.442695
        %v1358 = vpow.pop %v1357
        %v1359 = vsel %vm1313, %v1344, 0.0
        %v1360 = vsel %vm1313, %v1346, 0.0
        %v1361 = vadd.f32 %v1359, %v1360
        %v1362 = vsel %vm1313, %v1348, 0.0
        %v1363 = vadd.f32 %v1361, %v1362
        %v1364 = vsel %vm1313, %v1350, 0.0
        %v1365 = vadd.f32 %v1363, %v1364
        %v1366 = vsel %vm1313, %v1352, 0.0
        %v1367 = vadd.f32 %v1365, %v1366
        %v1368 = vsel %vm1313, %v1354, 0.0
        %v1369 = vadd.f32 %v1367, %v1368
        %v1370 = vsel %vm1313, %v1356, 0.0
        %v1371 = vadd.f32 %v1369, %v1370
        %v1372 = vsel %vm1313, %v1358, 0.0
        %v1373 = vadd.f32 %v1371, %v1372
        %v1374 = vrot.slane %v1373, 4
        %v1375 = vadd.f32 %v1373, %v1374
        %v1376 = vrot.slane %v1375, 2
        %v1377 = vadd.f32 %v1375, %v1376
        %v1378 = vrot.slane %v1377, 1
        %v1379 = vadd.f32 %v1377, %v1378
        %v1380 = vrcp.pop %v1379
        %v1381 = vmul.f32 %v1379, %v1380
        %v1382 = vsub.f32 1.0, %v1381
        %v1383 = vmul.f32 %v1380, %v1382
        %v1384 = vadd.f32 %v1380, %v1383
        %vm1385 = vweird.f32 %v1379
        %vm1386 = vweird.f32 %v1380
        %vm1387 = vmor %vm1385, %vm1386
        %v1388 = vsel %vm1387, %v1380, %v1384
        %v1389 = vand.u32 2147483647, %v1379
        %vm1390 = vcmp.eq.f32.partialorder %v1389, 8.507059e+37
        %v1391 = vand.u32 %v1379, 2147483648
        %v1392 = vor.u32 1.1754944e-38, %v1391
        %v1393 = vsel %vm1390, %v1392, %v1388
        %v1394 = vmul.f32 %v1344, %v1393
        %v1395 = vmul.f32 %v1346, %v1393
        %v1396 = vmul.f32 %v1348, %v1393
        %v1397 = vmul.f32 %v1350, %v1393
        %v1398 = vmul.f32 %v1352, %v1393
        %v1399 = vmul.f32 %v1354, %v1393
        %v1400 = vmul.f32 %v1356, %v1393
        %v1401 = vmul.f32 %v1358, %v1393
        %1403 = vset.pattern.permute.xlu0 0
        %1404 = vperm.xlu0 %1403, %v1394
        %v1405 = vpop.permute.xlu0 %1404
        %1408 = vset.pattern.permute.xlu0 0
        %1409 = vperm.xlu0 %1408, %v1395
        %v1410 = vpop.permute.xlu0 %1409
        %1413 = vset.pattern.permute.xlu0 0
        %1414 = vperm.xlu0 %1413, %v1396
        %v1415 = vpop.permute.xlu0 %1414
        %1418 = vset.pattern.permute.xlu0 0
        %1419 = vperm.xlu0 %1418, %v1397
        %v1420 = vpop.permute.xlu0 %1419
        %1423 = vset.pattern.permute.xlu0 0
        %1424 = vperm.xlu0 %1423, %v1398
        %v1425 = vpop.permute.xlu0 %1424
        %1428 = vset.pattern.permute.xlu0 0
        %1429 = vperm.xlu0 %1428, %v1399
        %v1430 = vpop.permute.xlu0 %1429
        %1433 = vset.pattern.permute.xlu0 0
        %1434 = vperm.xlu0 %1433, %v1400
        %v1435 = vpop.permute.xlu0 %1434
        %1438 = vset.pattern.permute.xlu0 0
        %1439 = vperm.xlu0 %1438, %v1401
        %v1440 = vpop.permute.xlu0 %1439
        %v1442 = vmul.f32 %v1405, %v1094
        %v1443 = vmul.f32 %v1405, %v1176
        %v1444 = vmul.f32 %v1410, %v1097
        %v1445 = vmul.f32 %v1410, %v1179
        %v1446 = vmul.f32 %v1415, %v1100
        %v1447 = vmul.f32 %v1415, %v1182
        %v1448 = vmul.f32 %v1420, %v1103
        %v1449 = vmul.f32 %v1420, %v1185
        %v1450 = vmul.f32 %v1425, %v1106
        %v1451 = vmul.f32 %v1425, %v1188
        %v1452 = vmul.f32 %v1430, %v1109
        %v1453 = vmul.f32 %v1430, %v1191
        %v1454 = vmul.f32 %v1435, %v1112
        %v1455 = vmul.f32 %v1435, %v1194
        %v1456 = vmul.f32 %v1440, %v1115
        %v1457 = vmul.f32 %v1440, %v1197
        %v1458 = vadd.f32 %v1442, %v1444
        %v1459 = vadd.f32 %v1458, %v1446
        %v1460 = vadd.f32 %v1459, %v1448
        %v1461 = vadd.f32 %v1460, %v1450
        %v1462 = vadd.f32 %v1461, %v1452
        %v1463 = vadd.f32 %v1462, %v1454
        %v1464 = vadd.f32 %v1463, %v1456
        %v1465 = vrot.slane %v1464, 4
        %v1466 = vadd.f32 %v1464, %v1465
        %v1467 = vrot.slane %v1466, 2
        %v1468 = vadd.f32 %v1466, %v1467
        %v1469 = vrot.slane %v1468, 1
        %v1470 = vadd.f32 %v1468, %v1469
        %v1471 = vadd.f32 %v1443, %v1445
        %v1472 = vadd.f32 %v1471, %v1447
        %v1473 = vadd.f32 %v1472, %v1449
        %v1474 = vadd.f32 %v1473, %v1451
        %v1475 = vadd.f32 %v1474, %v1453
        %v1476 = vadd.f32 %v1475, %v1455
        %v1477 = vadd.f32 %v1476, %v1457
        %v1478 = vrot.slane %v1477, 4
        %v1479 = vadd.f32 %v1477, %v1478
        %v1480 = vrot.slane %v1479, 2
        %v1481 = vadd.f32 %v1479, %v1480
        %v1482 = vrot.slane %v1481, 1
        %v1483 = vadd.f32 %v1481, %v1482
        %v1484 = vld [vmem:[#allocation7] sm:$0xff]
        %v1485 = vld [vmem:[#allocation7 + $0x8] sm:$0xff]
        %v1486 = vld [vmem:[#allocation7 + $0x10] sm:$0xff]
        %v1487 = vld [vmem:[#allocation7 + $0x18] sm:$0xff]
        %v1488 = vld [vmem:[#allocation7 + $0x20] sm:$0xff]
        %v1489 = vld [vmem:[#allocation7 + $0x28] sm:$0xff]
        %v1490 = vld [vmem:[#allocation7 + $0x30] sm:$0xff]
        %v1491 = vld [vmem:[#allocation7 + $0x38] sm:$0xff]
        %v1492 = vld [vmem:[#allocation7 + $0x40] sm:$0xff]
        %v1493 = vld [vmem:[#allocation7 + $0x48] sm:$0xff]
        %v1494 = vld [vmem:[#allocation7 + $0x50] sm:$0xff]
        %v1495 = vld [vmem:[#allocation7 + $0x58] sm:$0xff]
        %v1496 = vld [vmem:[#allocation7 + $0x60] sm:$0xff]
        %v1497 = vld [vmem:[#allocation7 + $0x68] sm:$0xff]
        %v1498 = vld [vmem:[#allocation7 + $0x70] sm:$0xff]
        %v1499 = vld [vmem:[#allocation7 + $0x78] sm:$0xff]
        %v1500 = vld [vmem:[#allocation7 + $0x80] sm:$0xff]
        %v1501 = vld [vmem:[#allocation7 + $0x88] sm:$0xff]
        %v1502 = vld [vmem:[#allocation7 + $0x90] sm:$0xff]
        %v1503 = vld [vmem:[#allocation7 + $0x98] sm:$0xff]
        %v1504 = vld [vmem:[#allocation7 + $0xa0] sm:$0xff]
        %v1505 = vld [vmem:[#allocation7 + $0xa8] sm:$0xff]
        %v1506 = vld [vmem:[#allocation7 + $0xb0] sm:$0xff]
        %v1507 = vld [vmem:[#allocation7 + $0xb8] sm:$0xff]
        %v1508 = vld [vmem:[#allocation7 + $0xc0] sm:$0xff]
        %v1509 = vld [vmem:[#allocation7 + $0xc8] sm:$0xff]
        %v1510 = vld [vmem:[#allocation7 + $0xd0] sm:$0xff]
        %v1511 = vld [vmem:[#allocation7 + $0xd8] sm:$0xff]
        %v1512 = vld [vmem:[#allocation7 + $0xe0] sm:$0xff]
        %v1513 = vld [vmem:[#allocation7 + $0xe8] sm:$0xff]
        %v1514 = vld [vmem:[#allocation7 + $0xf0] sm:$0xff]
        %v1515 = vld [vmem:[#allocation7 + $0xf8] sm:$0xff]
        %v1516 = vld [vmem:[#allocation7 + $0x100] sm:$0xff]
        %v1517 = vld [vmem:[#allocation7 + $0x108] sm:$0xff]
        %v1518 = vld [vmem:[#allocation7 + $0x110] sm:$0xff]
        %v1519 = vld [vmem:[#allocation7 + $0x118] sm:$0xff]
        %v1520 = vld [vmem:[#allocation7 + $0x120] sm:$0xff]
        %v1521 = vld [vmem:[#allocation7 + $0x128] sm:$0xff]
        %v1522 = vld [vmem:[#allocation7 + $0x130] sm:$0xff]
        %v1523 = vld [vmem:[#allocation7 + $0x138] sm:$0xff]
        %v1524 = vld [vmem:[#allocation7 + $0x140] sm:$0xff]
        %v1525 = vld [vmem:[#allocation7 + $0x148] sm:$0xff]
        %v1526 = vld [vmem:[#allocation7 + $0x150] sm:$0xff]
        %v1527 = vld [vmem:[#allocation7 + $0x158] sm:$0xff]
        %v1528 = vld [vmem:[#allocation7 + $0x160] sm:$0xff]
        %v1529 = vld [vmem:[#allocation7 + $0x168] sm:$0xff]
        %v1530 = vld [vmem:[#allocation7 + $0x170] sm:$0xff]
        %v1531 = vld [vmem:[#allocation7 + $0x178] sm:$0xff]
        %v1532 = vld [vmem:[#allocation7 + $0x180] sm:$0xff]
        %v1533 = vld [vmem:[#allocation7 + $0x188] sm:$0xff]
        %v1534 = vld [vmem:[#allocation7 + $0x190] sm:$0xff]
        %v1535 = vld [vmem:[#allocation7 + $0x198] sm:$0xff]
        %v1536 = vld [vmem:[#allocation7 + $0x1a0] sm:$0xff]
        %v1537 = vld [vmem:[#allocation7 + $0x1a8] sm:$0xff]
        %v1538 = vld [vmem:[#allocation7 + $0x1b0] sm:$0xff]
        %v1539 = vld [vmem:[#allocation7 + $0x1b8] sm:$0xff]
        %v1540 = vld [vmem:[#allocation7 + $0x1c0] sm:$0xff]
        %v1541 = vld [vmem:[#allocation7 + $0x1c8] sm:$0xff]
        %v1542 = vld [vmem:[#allocation7 + $0x1d0] sm:$0xff]
        %v1543 = vld [vmem:[#allocation7 + $0x1d8] sm:$0xff]
        %v1544 = vld [vmem:[#allocation7 + $0x1e0] sm:$0xff]
        %v1545 = vld [vmem:[#allocation7 + $0x1e8] sm:$0xff]
        %v1546 = vld [vmem:[#allocation7 + $0x1f0] sm:$0xff]
        %v1547 = vld [vmem:[#allocation7 + $0x1f8] sm:$0xff]
        %v1548 = vld [vmem:[%s5] sm:$0x3]
        %v1550 = vperm.slane %v1548, 0
        %v1551 = vperm.slane %v1548, 1
        %1554 = vmatpush.msra.mxu0 %v1514
        %1555 = vmatpush.msra.mxu0 %v1512
        %1556 = vmatpush.msra.mxu0 %v1510
        %1557 = vmatpush.msra.mxu0 %v1508
        %1558 = vmatpush.msra.mxu0 %v1506
        %1559 = vmatpush.msra.mxu0 %v1504
        %1560 = vmatpush.msra.mxu0 %v1502
        %1561 = vmatpush.msra.mxu0 %v1500
        %1562 = vmatpush.msra.mxu0 %v1498
        %1563 = vmatpush.msra.mxu0 %v1496
        %1564 = vmatpush.msra.mxu0 %v1494
        %1565 = vmatpush.msra.mxu0 %v1492
        %1566 = vmatpush.msra.mxu0 %v1490
        %1567 = vmatpush.msra.mxu0 %v1488
        %1568 = vmatpush.msra.mxu0 %v1486
        %1569 = vmatpush.msra.mxu0 %v1484
        %1570 = vmatmul.f32.gmra.mxu0 %v1470
        %v1571 = vpop.f32.mrf.mxu0
        %v1572 = vadd.f32 %v1550, %v1571
        %1573 = vdwg.mxu0
        %1574 = vmatpush.msra.mxu0 %v1546
        %1575 = vmatpush.msra.mxu0 %v1544
        %1576 = vmatpush.msra.mxu0 %v1542
        %1577 = vmatpush.msra.mxu0 %v1540
        %1578 = vmatpush.msra.mxu0 %v1538
        %1579 = vmatpush.msra.mxu0 %v1536
        %1580 = vmatpush.msra.mxu0 %v1534
        %1581 = vmatpush.msra.mxu0 %v1532
        %1582 = vmatpush.msra.mxu0 %v1530
        %1583 = vmatpush.msra.mxu0 %v1528
        %1584 = vmatpush.msra.mxu0 %v1526
        %1585 = vmatpush.msra.mxu0 %v1524
        %1586 = vmatpush.msra.mxu0 %v1522
        %1587 = vmatpush.msra.mxu0 %v1520
        %1588 = vmatpush.msra.mxu0 %v1518
        %1589 = vmatpush.msra.mxu0 %v1516
        %1590 = vmatmul.f32.gmra.mxu0 %v1483
        %v1591 = vpop.f32.mrf.mxu0
        %v1592 = vadd.f32 %v1572, %v1591
        %1593 = vdwg.mxu0
        %1594 = vmatpush.msra.mxu0 %v1515
        %1595 = vmatpush.msra.mxu0 %v1513
        %1596 = vmatpush.msra.mxu0 %v1511
        %1597 = vmatpush.msra.mxu0 %v1509
        %1598 = vmatpush.msra.mxu0 %v1507
        %1599 = vmatpush.msra.mxu0 %v1505
        %1600 = vmatpush.msra.mxu0 %v1503
        %1601 = vmatpush.msra.mxu0 %v1501
        %1602 = vmatpush.msra.mxu0 %v1499
        %1603 = vmatpush.msra.mxu0 %v1497
        %1604 = vmatpush.msra.mxu0 %v1495
        %1605 = vmatpush.msra.mxu0 %v1493
        %1606 = vmatpush.msra.mxu0 %v1491
        %1607 = vmatpush.msra.mxu0 %v1489
        %1608 = vmatpush.msra.mxu0 %v1487
        %1609 = vmatpush.msra.mxu0 %v1485
        %1610 = vmatmul.f32.gmra.mxu0 %v1470
        %v1611 = vpop.f32.mrf.mxu0
        %v1612 = vadd.f32 %v1551, %v1611
        %1613 = vdwg.mxu0
        %1614 = vmatpush.msra.mxu0 %v1547
        %1615 = vmatpush.msra.mxu0 %v1545
        %1616 = vmatpush.msra.mxu0 %v1543
        %1617 = vmatpush.msra.mxu0 %v1541
        %1618 = vmatpush.msra.mxu0 %v1539
        %1619 = vmatpush.msra.mxu0 %v1537
        %1620 = vmatpush.msra.mxu0 %v1535
        %1621 = vmatpush.msra.mxu0 %v1533
        %1622 = vmatpush.msra.mxu0 %v1531
        %1623 = vmatpush.msra.mxu0 %v1529
        %1624 = vmatpush.msra.mxu0 %v1527
        %1625 = vmatpush.msra.mxu0 %v1525
        %1626 = vmatpush.msra.mxu0 %v1523
        %1627 = vmatpush.msra.mxu0 %v1521
        %1628 = vmatpush.msra.mxu0 %v1519
        %1629 = vmatpush.msra.mxu0 %v1517
        %1630 = vmatmul.f32.gmra.mxu0 %v1483
        %v1631 = vpop.f32.mrf.mxu0
        %v1632 = vadd.f32 %v1612, %v1631
        %1633 = vdwg.mxu0
        %vm1634 = vcmask 1040384
        %v1635 = vsel %vm1634, %v1592, 0.0
        %v1636 = vsel %vm1634, %v1632, 0.0
        %v1637 = vadd.f32 %v1635, %v1636
        %1638 = vadd.xlane.f32.xlu0 %v1637
        %v1639 = vpop.xlane.xlu0 %1638
        %v1640 = vrcp.pop 256.0
        %v1641 = vmul.f32 256.0, %v1640
        %v1642 = vsub.f32 1.0, %v1641
        %v1643 = vmul.f32 %v1640, %v1642
        %v1644 = vadd.f32 %v1640, %v1643
        %vm1645 = vweird.f32 %v1640
        %v1646 = vsel %vm1645, %v1640, %v1644
        %v1647 = vmul.f32 %v1639, %v1646
        %v1648 = vsub.f32 %v1592, %v1647
        %v1649 = vsub.f32 %v1632, %v1647
        %v1650 = vmul.f32 %v1648, %v1648
        %v1651 = vmul.f32 %v1649, %v1649
        %v1652 = vsel %vm1634, %v1650, 0.0
        %v1653 = vsel %vm1634, %v1651, 0.0
        %v1654 = vadd.f32 %v1652, %v1653
        %1655 = vadd.xlane.f32.xlu0 %v1654
        %v1656 = vpop.xlane.xlu0 %1655
        %v1657 = vmul.f32 %v1656, %v1646
        %v1658 = vadd.f32 %v1657, 1e-05
        %v1659 = vrsqrt.pop %v1658
        %v1660 = vmul.f32 %v1659, %v1658
        %v1661 = vmul.f32 %v1660, %v1659
        %v1662 = vmul.f32 0.5, %v1661
        %v1663 = vsub.f32 1.5, %v1662
        %v1664 = vmul.f32 %v1659, %v1663
        %vm1665 = vweird.f32 %v1658
        %vm1666 = vweird.f32 %v1659
        %vm1667 = vmor %vm1665, %vm1666
        %v1668 = vsel %vm1667, %v1659, %v1664
        %v1669 = vmul.f32 %v1648, %v1668
        %v1670 = vmul.f32 %v1649, %v1668
        %v1671 = vld [vmem:[%s6] sm:$0x3]
        %v1673 = vperm.slane %v1671, 0
        %v1674 = vperm.slane %v1671, 1
        %v1677 = vmul.f32 %v1669, %v1673
        %v1678 = vmul.f32 %v1670, %v1674
        %v1679 = vld [vmem:[%s7] sm:$0x3]
        %v1681 = vperm.slane %v1679, 0
        %v1682 = vperm.slane %v1679, 1
        %v1685 = vadd.f32 %v1677, %v1681
        %v1686 = vadd.f32 %v1678, %v1682
        %v1687 = vmul.f32 %v1685, 0.5
        %v1688 = vmul.f32 %v1686, 0.5
        %v1689 = vmul.f32 %v1685, 0.70710677
        %v1690 = vmul.f32 %v1686, 0.70710677
        %v1691 = vmul.f32 %v1689, %v1689
        %v1692 = vmin.f32 16.0, %v1691
        %v1693 = vmul.f32 %v1692, 2.1237322e-06
        %v1694 = vadd.f32 %v1693, 0.00028619796
        %v1695 = vmul.f32 %v1692, %v1694
        %v1696 = vadd.f32 %v1695, 0.0036580483
        %v1697 = vmul.f32 %v1692, %v1696
        %v1698 = vadd.f32 %v1697, 0.05243302
        %v1699 = vmul.f32 %v1692, %v1698
        %v1700 = vadd.f32 %v1699, 0.18741608
        %v1701 = vmul.f32 %v1692, %v1700
        %v1702 = vadd.f32 %v1701, 1.1283791
        %v1703 = vmul.f32 %v1689, %v1702
        %v1704 = vmul.f32 %v1692, 3.8918573e-05
        %v1705 = vadd.f32 %v1704, 0.001143296
        %v1706 = vmul.f32 %v1692, %v1705
        %v1707 = vadd.f32 %v1706, 0.014752088
        %v1708 = vmul.f32 %v1692, %v1707
        %v1709 = vadd.f32 %v1708, 0.112945676
        %v1710 = vmul.f32 %v1692, %v1709
        %v1711 = vadd.f32 %v1710, 0.4994258
        %v1712 = vmul.f32 %v1692, %v1711
        %v1713 = vadd.f32 %v1712, 1.0
        %v1714 = vrcp.pop %v1713
        %v1715 = vmul.f32 %v1713, %v1714
        %v1716 = vsub.f32 1.0, %v1715
        %v1717 = vmul.f32 %v1714, %v1716
        %v1718 = vadd.f32 %v1714, %v1717
        %vm1719 = vweird.f32 %v1713
        %vm1720 = vweird.f32 %v1714
        %vm1721 = vmor %vm1719, %vm1720
        %v1722 = vsel %vm1721, %v1714, %v1718
        %v1723 = vand.u32 2147483647, %v1713
        %vm1724 = vcmp.eq.f32.partialorder %v1723, 8.507059e+37
        %v1725 = vand.u32 %v1713, 2147483648
        %v1726 = vor.u32 1.1754944e-38, %v1725
        %v1727 = vsel %vm1724, %v1726, %v1722
        %v1728 = vmul.f32 %v1703, %v1727
        %v1729 = vmin.f32 %v1728, 1.0
        %v1730 = vmax.f32 %v1729, -1.0
        %v1731 = vmul.f32 %v1690, %v1690
        %v1732 = vmin.f32 16.0, %v1731
        %v1733 = vmul.f32 %v1732, 2.1237322e-06
        %v1734 = vadd.f32 %v1733, 0.00028619796
        %v1735 = vmul.f32 %v1732, %v1734
        %v1736 = vadd.f32 %v1735, 0.0036580483
        %v1737 = vmul.f32 %v1732, %v1736
        %v1738 = vadd.f32 %v1737, 0.05243302
        %v1739 = vmul.f32 %v1732, %v1738
        %v1740 = vadd.f32 %v1739, 0.18741608
        %v1741 = vmul.f32 %v1732, %v1740
        %v1742 = vadd.f32 %v1741, 1.1283791
        %v1743 = vmul.f32 %v1690, %v1742
        %v1744 = vmul.f32 %v1732, 3.8918573e-05
        %v1745 = vadd.f32 %v1744, 0.001143296
        %v1746 = vmul.f32 %v1732, %v1745
        %v1747 = vadd.f32 %v1746, 0.014752088
        %v1748 = vmul.f32 %v1732, %v1747
        %v1749 = vadd.f32 %v1748, 0.112945676
        %v1750 = vmul.f32 %v1732, %v1749
        %v1751 = vadd.f32 %v1750, 0.4994258
        %v1752 = vmul.f32 %v1732, %v1751
        %v1753 = vadd.f32 %v1752, 1.0
        %v1754 = vrcp.pop %v1753
        %v1755 = vmul.f32 %v1753, %v1754
        %v1756 = vsub.f32 1.0, %v1755
        %v1757 = vmul.f32 %v1754, %v1756
        %v1758 = vadd.f32 %v1754, %v1757
        %vm1759 = vweird.f32 %v1753
        %vm1760 = vweird.f32 %v1754
        %vm1761 = vmor %vm1759, %vm1760
        %v1762 = vsel %vm1761, %v1754, %v1758
        %v1763 = vand.u32 2147483647, %v1753
        %vm1764 = vcmp.eq.f32.partialorder %v1763, 8.507059e+37
        %v1765 = vand.u32 %v1753, 2147483648
        %v1766 = vor.u32 1.1754944e-38, %v1765
        %v1767 = vsel %vm1764, %v1766, %v1762
        %v1768 = vmul.f32 %v1743, %v1767
        %v1769 = vmin.f32 %v1768, 1.0
        %v1770 = vmax.f32 %v1769, -1.0
        %v1771 = vadd.f32 %v1730, 1.0
        %v1772 = vadd.f32 %v1770, 1.0
        %v1773 = vmul.f32 %v1687, %v1771
        %v1774 = vmul.f32 %v1688, %v1772
        %v1775 = vld [vmem:[#allocation8] sm:$0xff]
        %v1776 = vld [vmem:[#allocation8 + $0x8] sm:$0xff]
        %v1777 = vld [vmem:[#allocation8 + $0x10] sm:$0xff]
        %v1778 = vld [vmem:[#allocation8 + $0x18] sm:$0xff]
        %v1779 = vld [vmem:[#allocation8 + $0x20] sm:$0xff]
        %v1780 = vld [vmem:[#allocation8 + $0x28] sm:$0xff]
        %v1781 = vld [vmem:[#allocation8 + $0x30] sm:$0xff]
        %v1782 = vld [vmem:[#allocation8 + $0x38] sm:$0xff]
        %v1783 = vld [vmem:[#allocation8 + $0x40] sm:$0xff]
        %v1784 = vld [vmem:[#allocation8 + $0x48] sm:$0xff]
        %v1785 = vld [vmem:[#allocation8 + $0x50] sm:$0xff]
        %v1786 = vld [vmem:[#allocation8 + $0x58] sm:$0xff]
        %v1787 = vld [vmem:[#allocation8 + $0x60] sm:$0xff]
        %v1788 = vld [vmem:[#allocation8 + $0x68] sm:$0xff]
        %v1789 = vld [vmem:[#allocation8 + $0x70] sm:$0xff]
        %v1790 = vld [vmem:[#allocation8 + $0x78] sm:$0xff]
        %v1791 = vld [vmem:[#allocation8 + $0x80] sm:$0xff]
        %v1792 = vld [vmem:[#allocation8 + $0x88] sm:$0xff]
        %v1793 = vld [vmem:[#allocation8 + $0x90] sm:$0xff]
        %v1794 = vld [vmem:[#allocation8 + $0x98] sm:$0xff]
        %v1795 = vld [vmem:[#allocation8 + $0xa0] sm:$0xff]
        %v1796 = vld [vmem:[#allocation8 + $0xa8] sm:$0xff]
        %v1797 = vld [vmem:[#allocation8 + $0xb0] sm:$0xff]
        %v1798 = vld [vmem:[#allocation8 + $0xb8] sm:$0xff]
        %v1799 = vld [vmem:[#allocation8 + $0xc0] sm:$0xff]
        %v1800 = vld [vmem:[#allocation8 + $0xc8] sm:$0xff]
        %v1801 = vld [vmem:[#allocation8 + $0xd0] sm:$0xff]
        %v1802 = vld [vmem:[#allocation8 + $0xd8] sm:$0xff]
        %v1803 = vld [vmem:[#allocation8 + $0xe0] sm:$0xff]
        %v1804 = vld [vmem:[#allocation8 + $0xe8] sm:$0xff]
        %v1805 = vld [vmem:[#allocation8 + $0xf0] sm:$0xff]
        %v1806 = vld [vmem:[#allocation8 + $0xf8] sm:$0xff]
        %v1807 = vld [vmem:[%s9] sm:$0x1]
        %1808 = vmatpush.msra.mxu0 %v1790
        %1809 = vmatpush.msra.mxu0 %v1789
        %1810 = vmatpush.msra.mxu0 %v1788
        %1811 = vmatpush.msra.mxu0 %v1787
        %1812 = vmatpush.msra.mxu0 %v1786
        %1813 = vmatpush.msra.mxu0 %v1785
        %1814 = vmatpush.msra.mxu0 %v1784
        %1815 = vmatpush.msra.mxu0 %v1783
        %1816 = vmatpush.msra.mxu0 %v1782
        %1817 = vmatpush.msra.mxu0 %v1781
        %1818 = vmatpush.msra.mxu0 %v1780
        %1819 = vmatpush.msra.mxu0 %v1779
        %1820 = vmatpush.msra.mxu0 %v1778
        %1821 = vmatpush.msra.mxu0 %v1777
        %1822 = vmatpush.msra.mxu0 %v1776
        %1823 = vmatpush.msra.mxu0 %v1775
        %1824 = vmatmul.f32.gmra.mxu0 %v1773
        %v1825 = vpop.f32.mrf.mxu0
        %v1826 = vadd.f32 %v1807, %v1825
        %1827 = vdwg.mxu0
        %1828 = vmatpush.msra.mxu0 %v1806
        %1829 = vmatpush.msra.mxu0 %v1805
        %1830 = vmatpush.msra.mxu0 %v1804
        %1831 = vmatpush.msra.mxu0 %v1803
        %1832 = vmatpush.msra.mxu0 %v1802
        %1833 = vmatpush.msra.mxu0 %v1801
        %1834 = vmatpush.msra.mxu0 %v1800
        %1835 = vmatpush.msra.mxu0 %v1799
        %1836 = vmatpush.msra.mxu0 %v1798
        %1837 = vmatpush.msra.mxu0 %v1797
        %1838 = vmatpush.msra.mxu0 %v1796
        %1839 = vmatpush.msra.mxu0 %v1795
        %1840 = vmatpush.msra.mxu0 %v1794
        %1841 = vmatpush.msra.mxu0 %v1793
        %1842 = vmatpush.msra.mxu0 %v1792
        %1843 = vmatpush.msra.mxu0 %v1791
        %1844 = vmatmul.f32.gmra.mxu0 %v1774
        %v1845 = vpop.f32.mrf.mxu0
        %v1846 = vadd.f32 %v1826, %v1845
        %1847 = vdwg.mxu0
        %v1848 = vsel %vm1634, %v1846, 0.0
        %1849 = vadd.xlane.f32.xlu0 %v1848
        %v1850 = vpop.xlane.xlu0 %1849
        %v1851 = vrcp.pop 128.0
        %v1852 = vmul.f32 128.0, %v1851
        %v1853 = vsub.f32 1.0, %v1852
        %v1854 = vmul.f32 %v1851, %v1853
        %v1855 = vadd.f32 %v1851, %v1854
        %vm1856 = vweird.f32 %v1851
        %v1857 = vsel %vm1856, %v1851, %v1855
        %v1858 = vmul.f32 %v1850, %v1857
        %v1859 = vsub.f32 %v1846, %v1858
        %v1860 = vmul.f32 %v1859, %v1859
        %v1861 = vsel %vm1634, %v1860, 0.0
        %1862 = vadd.xlane.f32.xlu0 %v1861
        %v1863 = vpop.xlane.xlu0 %1862
        %v1864 = vmul.f32 %v1863, %v1857
        %v1865 = vadd.f32 %v1864, 1e-05
        %v1866 = vrsqrt.pop %v1865
        %v1867 = vmul.f32 %v1866, %v1865
        %v1868 = vmul.f32 %v1867, %v1866
        %v1869 = vmul.f32 0.5, %v1868
        %v1870 = vsub.f32 1.5, %v1869
        %v1871 = vmul.f32 %v1866, %v1870
        %vm1872 = vweird.f32 %v1865
        %vm1873 = vweird.f32 %v1866
        %vm1874 = vmor %vm1872, %vm1873
        %v1875 = vsel %vm1874, %v1866, %v1871
        %v1876 = vmul.f32 %v1859, %v1875
        %v1877 = vld [vmem:[%s10] sm:$0x1]
        %v1878 = vmul.f32 %v1876, %v1877
        %v1879 = vld [vmem:[%s11] sm:$0x1]
        %v1880 = vadd.f32 %v1878, %v1879
        %v1881 = vmul.f32 %v1880, 0.5
        %v1882 = vmul.f32 %v1880, 0.70710677
        %v1883 = vmul.f32 %v1882, %v1882
        %v1884 = vmin.f32 16.0, %v1883
        %v1885 = vmul.f32 %v1884, 2.1237322e-06
        %v1886 = vadd.f32 %v1885, 0.00028619796
        %v1887 = vmul.f32 %v1884, %v1886
        %v1888 = vadd.f32 %v1887, 0.0036580483
        %v1889 = vmul.f32 %v1884, %v1888
        %v1890 = vadd.f32 %v1889, 0.05243302
        %v1891 = vmul.f32 %v1884, %v1890
        %v1892 = vadd.f32 %v1891, 0.18741608
        %v1893 = vmul.f32 %v1884, %v1892
        %v1894 = vadd.f32 %v1893, 1.1283791
        %v1895 = vmul.f32 %v1882, %v1894
        %v1896 = vmul.f32 %v1884, 3.8918573e-05
        %v1897 = vadd.f32 %v1896, 0.001143296
        %v1898 = vmul.f32 %v1884, %v1897
        %v1899 = vadd.f32 %v1898, 0.014752088
        %v1900 = vmul.f32 %v1884, %v1899
        %v1901 = vadd.f32 %v1900, 0.112945676
        %v1902 = vmul.f32 %v1884, %v1901
        %v1903 = vadd.f32 %v1902, 0.4994258
        %v1904 = vmul.f32 %v1884, %v1903
        %v1905 = vadd.f32 %v1904, 1.0
        %v1906 = vrcp.pop %v1905
        %v1907 = vmul.f32 %v1905, %v1906
        %v1908 = vsub.f32 1.0, %v1907
        %v1909 = vmul.f32 %v1906, %v1908
        %v1910 = vadd.f32 %v1906, %v1909
        %vm1911 = vweird.f32 %v1905
        %vm1912 = vweird.f32 %v1906
        %vm1913 = vmor %vm1911, %vm1912
        %v1914 = vsel %vm1913, %v1906, %v1910
        %v1915 = vand.u32 2147483647, %v1905
        %vm1916 = vcmp.eq.f32.partialorder %v1915, 8.507059e+37
        %v1917 = vand.u32 %v1905, 2147483648
        %v1918 = vor.u32 1.1754944e-38, %v1917
        %v1919 = vsel %vm1916, %v1918, %v1914
        %v1920 = vmul.f32 %v1895, %v1919
        %v1921 = vmin.f32 %v1920, 1.0
        %v1922 = vmax.f32 %v1921, -1.0
        %v1923 = vadd.f32 %v1922, 1.0
        %v1924 = vmul.f32 %v1881, %v1923
        %v1925 = vld [vmem:[#allocation10] sm:$0xff]
        %v1926 = vld [vmem:[#allocation10 + $0x8] sm:$0xff]
        %v1927 = vld [vmem:[#allocation10 + $0x10] sm:$0xff]
        %v1928 = vld [vmem:[#allocation10 + $0x18] sm:$0xff]
        %v1929 = vld [vmem:[#allocation10 + $0x20] sm:$0xff]
        %v1930 = vld [vmem:[#allocation10 + $0x28] sm:$0xff]
        %v1931 = vld [vmem:[#allocation10 + $0x30] sm:$0xff]
        %v1932 = vld [vmem:[#allocation10 + $0x38] sm:$0xff]
        %v1933 = vld [vmem:[#allocation10 + $0x40] sm:$0xff]
        %v1934 = vld [vmem:[#allocation10 + $0x48] sm:$0xff]
        %v1935 = vld [vmem:[#allocation10 + $0x50] sm:$0xff]
        %v1936 = vld [vmem:[#allocation10 + $0x58] sm:$0xff]
        %v1937 = vld [vmem:[#allocation10 + $0x60] sm:$0xff]
        %v1938 = vld [vmem:[#allocation10 + $0x68] sm:$0xff]
        %v1939 = vld [vmem:[#allocation10 + $0x70] sm:$0xff]
        %v1940 = vld [vmem:[#allocation10 + $0x78] sm:$0xff]
        %v1941 = vld [vmem:[%s13] sm:$0x1]
        %1942 = vmatpush.msra.mxu0 %v1940
        %1943 = vmatpush.msra.mxu0 %v1939
        %1944 = vmatpush.msra.mxu0 %v1938
        %1945 = vmatpush.msra.mxu0 %v1937
        %1946 = vmatpush.msra.mxu0 %v1936
        %1947 = vmatpush.msra.mxu0 %v1935
        %1948 = vmatpush.msra.mxu0 %v1934
        %1949 = vmatpush.msra.mxu0 %v1933
        %1950 = vmatpush.msra.mxu0 %v1932
        %1951 = vmatpush.msra.mxu0 %v1931
        %1952 = vmatpush.msra.mxu0 %v1930
        %1953 = vmatpush.msra.mxu0 %v1929
        %1954 = vmatpush.msra.mxu0 %v1928
        %1955 = vmatpush.msra.mxu0 %v1927
        %1956 = vmatpush.msra.mxu0 %v1926
        %1957 = vmatpush.msra.mxu0 %v1925
        %1958 = vmatmul.f32.gmra.mxu0 %v1924
        %v1959 = vpop.f32.mrf.mxu0
        %v1960 = vadd.f32 %v1941, %v1959
        %1961 = vdwg.mxu0
        %v1962 = vsel %vm1634, %v1960, 0.0
        %1963 = vadd.xlane.f32.xlu0 %v1962
        %v1964 = vpop.xlane.xlu0 %1963
        %v1965 = vmul.f32 %v1964, %v1857
        %v1966 = vsub.f32 %v1960, %v1965
        %v1967 = vmul.f32 %v1966, %v1966
        %v1968 = vsel %vm1634, %v1967, 0.0
        %1969 = vadd.xlane.f32.xlu0 %v1968
        %v1970 = vpop.xlane.xlu0 %1969
        %v1971 = vmul.f32 %v1970, %v1857
        %v1972 = vadd.f32 %v1971, 1e-05
        %v1973 = vrsqrt.pop %v1972
        %v1974 = vmul.f32 %v1973, %v1972
        %v1975 = vmul.f32 %v1974, %v1973
        %v1976 = vmul.f32 0.5, %v1975
        %v1977 = vsub.f32 1.5, %v1976
        %v1978 = vmul.f32 %v1973, %v1977
        %vm1979 = vweird.f32 %v1972
        %vm1980 = vweird.f32 %v1973
        %vm1981 = vmor %vm1979, %vm1980
        %v1982 = vsel %vm1981, %v1973, %v1978
        %v1983 = vmul.f32 %v1966, %v1982
        %v1984 = vld [vmem:[%s14] sm:$0x1]
        %v1985 = vmul.f32 %v1983, %v1984
        %v1986 = vld [vmem:[%s15] sm:$0x1]
        %v1987 = vadd.f32 %v1985, %v1986
        %v1988 = vmul.f32 %v1987, 0.5
        %v1989 = vmul.f32 %v1987, 0.70710677
        %v1990 = vmul.f32 %v1989, %v1989
        %v1991 = vmin.f32 16.0, %v1990
        %v1992 = vmul.f32 %v1991, 2.1237322e-06
        %v1993 = vadd.f32 %v1992, 0.00028619796
        %v1994 = vmul.f32 %v1991, %v1993
        %v1995 = vadd.f32 %v1994, 0.0036580483
        %v1996 = vmul.f32 %v1991, %v1995
        %v1997 = vadd.f32 %v1996, 0.05243302
        %v1998 = vmul.f32 %v1991, %v1997
        %v1999 = vadd.f32 %v1998, 0.18741608
        %v2000 = vmul.f32 %v1991, %v1999
        %v2001 = vadd.f32 %v2000, 1.1283791
        %v2002 = vmul.f32 %v1989, %v2001
        %v2003 = vmul.f32 %v1991, 3.8918573e-05
        %v2004 = vadd.f32 %v2003, 0.001143296
        %v2005 = vmul.f32 %v1991, %v2004
        %v2006 = vadd.f32 %v2005, 0.014752088
        %v2007 = vmul.f32 %v1991, %v2006
        %v2008 = vadd.f32 %v2007, 0.112945676
        %v2009 = vmul.f32 %v1991, %v2008
        %v2010 = vadd.f32 %v2009, 0.4994258
        %v2011 = vmul.f32 %v1991, %v2010
        %v2012 = vadd.f32 %v2011, 1.0
        %v2013 = vrcp.pop %v2012
        %v2014 = vmul.f32 %v2012, %v2013
        %v2015 = vsub.f32 1.0, %v2014
        %v2016 = vmul.f32 %v2013, %v2015
        %v2017 = vadd.f32 %v2013, %v2016
        %vm2018 = vweird.f32 %v2012
        %vm2019 = vweird.f32 %v2013
        %vm2020 = vmor %vm2018, %vm2019
        %v2021 = vsel %vm2020, %v2013, %v2017
        %v2022 = vand.u32 2147483647, %v2012
        %vm2023 = vcmp.eq.f32.partialorder %v2022, 8.507059e+37
        %v2024 = vand.u32 %v2012, 2147483648
        %v2025 = vor.u32 1.1754944e-38, %v2024
        %v2026 = vsel %vm2023, %v2025, %v2021
        %v2027 = vmul.f32 %v2002, %v2026
        %v2028 = vmin.f32 %v2027, 1.0
        %v2029 = vmax.f32 %v2028, -1.0
        %v2030 = vadd.f32 %v2029, 1.0
        %v2031 = vmul.f32 %v1988, %v2030
        %v2032 = vld [vmem:[#allocation11] sm:$0xff]
        %v2033 = vld [vmem:[#allocation11 + $0x8] sm:$0xff]
        %v2034 = vld [vmem:[#allocation11 + $0x10] sm:$0xff]
        %v2035 = vld [vmem:[#allocation11 + $0x18] sm:$0xff]
        %v2036 = vld [vmem:[#allocation11 + $0x20] sm:$0xff]
        %v2037 = vld [vmem:[#allocation11 + $0x28] sm:$0xff]
        %v2038 = vld [vmem:[#allocation11 + $0x30] sm:$0xff]
        %v2039 = vld [vmem:[#allocation11 + $0x38] sm:$0xff]
        %v2040 = vld [vmem:[#allocation11 + $0x40] sm:$0xff]
        %v2041 = vld [vmem:[#allocation11 + $0x48] sm:$0xff]
        %v2042 = vld [vmem:[#allocation11 + $0x50] sm:$0xff]
        %v2043 = vld [vmem:[#allocation11 + $0x58] sm:$0xff]
        %v2044 = vld [vmem:[#allocation11 + $0x60] sm:$0xff]
        %v2045 = vld [vmem:[#allocation11 + $0x68] sm:$0xff]
        %v2046 = vld [vmem:[#allocation11 + $0x70] sm:$0xff]
        %v2047 = vld [vmem:[#allocation11 + $0x78] sm:$0xff]
        %v2048 = vld [vmem:[%s17] sm:$0x1]
        %2049 = vmatpush.msra.mxu0 %v2047
        %2050 = vmatpush.msra.mxu0 %v2046
        %2051 = vmatpush.msra.mxu0 %v2045
        %2052 = vmatpush.msra.mxu0 %v2044
        %2053 = vmatpush.msra.mxu0 %v2043
        %2054 = vmatpush.msra.mxu0 %v2042
        %2055 = vmatpush.msra.mxu0 %v2041
        %2056 = vmatpush.msra.mxu0 %v2040
        %2057 = vmatpush.msra.mxu0 %v2039
        %2058 = vmatpush.msra.mxu0 %v2038
        %2059 = vmatpush.msra.mxu0 %v2037
        %2060 = vmatpush.msra.mxu0 %v2036
        %2061 = vmatpush.msra.mxu0 %v2035
        %2062 = vmatpush.msra.mxu0 %v2034
        %2063 = vmatpush.msra.mxu0 %v2033
        %2064 = vmatpush.msra.mxu0 %v2032
        %2065 = vmatmul.f32.gmra.mxu0 %v2031
        %v2066 = vpop.f32.mrf.mxu0
        %v2067 = vadd.f32 %v2048, %v2066
        %2068 = vdwg.mxu0
        %v2069 = vsel %vm1634, %v2067, 0.0
        %2070 = vadd.xlane.f32.xlu0 %v2069
        %v2071 = vpop.xlane.xlu0 %2070
        %v2072 = vmul.f32 %v2071, %v1857
        %v2073 = vsub.f32 %v2067, %v2072
        %v2074 = vmul.f32 %v2073, %v2073
        %v2075 = vsel %vm1634, %v2074, 0.0
        %2076 = vadd.xlane.f32.xlu0 %v2075
        %v2077 = vpop.xlane.xlu0 %2076
        %v2078 = vmul.f32 %v2077, %v1857
        %v2079 = vadd.f32 %v2078, 1e-05
        %v2080 = vrsqrt.pop %v2079
        %v2081 = vmul.f32 %v2080, %v2079
        %v2082 = vmul.f32 %v2081, %v2080
        %v2083 = vmul.f32 0.5, %v2082
        %v2084 = vsub.f32 1.5, %v2083
        %v2085 = vmul.f32 %v2080, %v2084
        %vm2086 = vweird.f32 %v2079
        %vm2087 = vweird.f32 %v2080
        %vm2088 = vmor %vm2086, %vm2087
        %v2089 = vsel %vm2088, %v2080, %v2085
        %v2090 = vmul.f32 %v2073, %v2089
        %v2091 = vld [vmem:[%s18] sm:$0x1]
        %v2092 = vmul.f32 %v2090, %v2091
        %v2093 = vld [vmem:[%s19] sm:$0x1]
        %v2094 = vadd.f32 %v2092, %v2093
        %v2095 = vmul.f32 %v2094, 0.5
        %v2096 = vmul.f32 %v2094, 0.70710677
        %v2097 = vmul.f32 %v2096, %v2096
        %v2098 = vmin.f32 16.0, %v2097
        %v2099 = vmul.f32 %v2098, 2.1237322e-06
        %v2100 = vadd.f32 %v2099, 0.00028619796
        %v2101 = vmul.f32 %v2098, %v2100
        %v2102 = vadd.f32 %v2101, 0.0036580483
        %v2103 = vmul.f32 %v2098, %v2102
        %v2104 = vadd.f32 %v2103, 0.05243302
        %v2105 = vmul.f32 %v2098, %v2104
        %v2106 = vadd.f32 %v2105, 0.18741608
        %v2107 = vmul.f32 %v2098, %v2106
        %v2108 = vadd.f32 %v2107, 1.1283791
        %v2109 = vmul.f32 %v2096, %v2108
        %v2110 = vmul.f32 %v2098, 3.8918573e-05
        %v2111 = vadd.f32 %v2110, 0.001143296
        %v2112 = vmul.f32 %v2098, %v2111
        %v2113 = vadd.f32 %v2112, 0.014752088
        %v2114 = vmul.f32 %v2098, %v2113
        %v2115 = vadd.f32 %v2114, 0.112945676
        %v2116 = vmul.f32 %v2098, %v2115
        %v2117 = vadd.f32 %v2116, 0.4994258
        %v2118 = vmul.f32 %v2098, %v2117
        %v2119 = vadd.f32 %v2118, 1.0
        %v2120 = vrcp.pop %v2119
        %v2121 = vmul.f32 %v2119, %v2120
        %v2122 = vsub.f32 1.0, %v2121
        %v2123 = vmul.f32 %v2120, %v2122
        %v2124 = vadd.f32 %v2120, %v2123
        %vm2125 = vweird.f32 %v2119
        %vm2126 = vweird.f32 %v2120
        %vm2127 = vmor %vm2125, %vm2126
        %v2128 = vsel %vm2127, %v2120, %v2124
        %v2129 = vand.u32 2147483647, %v2119
        %vm2130 = vcmp.eq.f32.partialorder %v2129, 8.507059e+37
        %v2131 = vand.u32 %v2119, 2147483648
        %v2132 = vor.u32 1.1754944e-38, %v2131
        %v2133 = vsel %vm2130, %v2132, %v2128
        %v2134 = vmul.f32 %v2109, %v2133
        %v2135 = vmin.f32 %v2134, 1.0
        %v2136 = vmax.f32 %v2135, -1.0
        %v2137 = vadd.f32 %v2136, 1.0
        %v2138 = vmul.f32 %v2095, %v2137
        %2139 = vst [vmem:[%s721] sm:$0x1] %v2138
        %s2140 = sand.u32 %s471, 1
        %s2141 = scalar_lea.sflag [#allocation4], %s2140
        %s2142 = sand.u32 %s471, 1
        %s2143 = scalar_lea.vmem [#allocation13], %s2142
        // Predicated region
        $region125: #{tpu_custom_call.1} parent=99 // pred_check
          %p2144 = pneg %p481
        $region126: #{tpu_custom_call.1} parent=99 // pred_check_branch
          %2146 = sbr.rel (%p2144) target = $region128
        $region127: #{tpu_custom_call.1} parent=99 // pred_region
          %2148 = vsyncadd %s2141, 0
          %s2149 = scalar_lea.hbm %s20, %s38
          %s2151 = sshll.u32 %s2143, 4
          %s2152 = int_to_ptr.vmem [resolvable:$true] %s2151
          %s2153 = sshll.u32 %s2149, 4
          %s2154 = int_to_ptr.hbm [resolvable:$true] %s2153
          %2156 = dma.vmem_to_hbm [thread:$0]  %s2152, 16, %s2154, %s2141
        $region128: #{tpu_custom_call.1} parent=99 // pred_fallthru
          _
      $region100: #{tpu_custom_call.1} parent=5 // pred_fallthru
        _
      %p2157 = scmp.le.s32.totalorder 2, %s33
      // Predicated region
      $region129: #{tpu_custom_call.1} parent=5 // pred_check
        %p2158 = pneg %p2157
      $region130: #{tpu_custom_call.1} parent=5 // pred_check_branch
        %2160 = sbr.rel (%p2158) target = $region132
      $region131: #{tpu_custom_call.1} parent=5 // pred_region
        %s2161 = ssub.s32 %s33, 2
        // Predicated region
        $region133: #{tpu_custom_call.1} parent=131 // pred_check
          %p2162 = pneg %p487
        $region134: #{tpu_custom_call.1} parent=131 // pred_check_branch
          %2164 = sbr.rel (%p2162) target = $region136
        $region135: #{tpu_custom_call.1} parent=131 // pred_region
          %s2165 = sand.u32 %s472, 1
          %s2166 = scalar_lea.sflag [#allocation4], %s2165
          %s2167 = sand.u32 %s472, 1
          %s2168 = scalar_lea.vmem [#allocation13], %s2167
          %2170 = dma.done %s2166, 16
        $region136: #{tpu_custom_call.1} parent=131 // pred_fallthru
          _
      $region132: #{tpu_custom_call.1} parent=5 // pred_fallthru
        _
    $region6: #{tpu_custom_call.1} parent=1 // loop_footer
      %s37 = sadd.s32 1, %s33
    $region7: #{tpu_custom_call.1} parent=1 // loop_footer_branch
      %32 = sbr.rel target = $region3
    $region8: #{tpu_custom_call.1} parent=1 // loop_exit
      _
    %2171 = vsyncpa [#allocation3], 1
    %s2172 = scalar_lea.sflag [#allocation3], 1
    %2173 = vsyncpa %s2172, 1
    %2174 = vsyncpa [#allocation6], 1
    %2175 = vsyncpa [#allocation9], 1
    %2176 = vsyncpa [#allocation12], 1
    %2177 = vsyncpa [#allocation4], 1
    %s2178 = scalar_lea.sflag [#allocation4], 1
    %2179 = vsyncpa %s2178, 1

</llo_original>
